<compile_context>
chip_gen: v5e
topology: v5e:2x2
jax: 0.10.0
libtpu: 0.0.40
codegen_flags: <defaults>
</compile_context>

<pallas_src>
import functools

import jax
import jax.numpy as jnp
from jax.experimental import pallas as pl
from jax.experimental.pallas import tpu as pltpu


def _round_up(x, m):
  return ((x + m - 1) // m) * m


def _vmem_capacity_bytes():
  """Physical VMEM per TensorCore; falls back to the v5e/v6e size."""
  try:
    return int(pltpu.get_tpu_info().vmem_capacity_bytes)
  except Exception:                      # no TPU info available: assume 128 MiB
    return 128 * 1024 * 1024


def _pick_tile(n_pad, max_tile):
  """Largest row tile (multiple of 16) dividing n_pad, <= max_tile, preferring
  >= 2 grid steps so dimension_semantics=("parallel",) can engage both v7x TCs."""
  divs = [d for d in range(16, n_pad + 1, 16) if n_pad % d == 0]
  if not divs:
    return n_pad
  multi = [d for d in divs if d <= max_tile and n_pad // d >= 2]
  if multi:
    return max(multi)
  single = [d for d in divs if d <= max_tile]
  return max(single) if single else min(divs)


def _bspec(block_shape, index_map, single_buffer=False):
  """BlockSpec; grid-invariant operands get a single pipeline buffer."""
  if single_buffer:
    try:
      return pl.BlockSpec(block_shape, index_map, pipeline_mode=pl.Buffered(1))
    except (AttributeError, TypeError):  # jax without pipeline_mode / Buffered
      pass
  return pl.BlockSpec(block_shape, index_map)


def _masked_softmax_rows(vec, mask, eps):
  """numerical_stability_masked_softmax over the last (lane) axis, f32."""
  mv = vec * mask
  mx = jnp.max(mv, axis=-1, keepdims=True)
  e = jnp.exp(mv - mx) * mask
  s = jnp.sum(e, axis=-1, keepdims=True) + eps
  return e * pl.reciprocal(s, approx=True)         # EUP slot, frees VALU


# ----------------------------- kernel 1: relation stage ----------------------


def rel_kernel(pr_ref, w_ps_ref, w_po_ref, w_rr_ref, w_up_ref,
               b_re_ref, b_ts_ref, b_to_ref,
               upd_rel_ref, atte_ref, *, h_pad, inv_sqrt_h):
  f32, bf16 = jnp.float32, jnp.bfloat16
  pr = pr_ref[...]                       # (TR, 3*H_pad) bf16 = [ps | po | rl]
  ps = pr[:, :h_pad]                     # static 128-aligned lane slices
  po = pr[:, h_pad:2 * h_pad]
  rl = pr[:, 2 * h_pad:]

  # N-concatenated weights per shared LHS (review: fill both 128-lane MXU
  # column halves on v6e/v7x):
  #   m_ps = ps  @ [W_re_s | W_ts_p]      m_po = po  @ [W_re_o | W_to_p]
  #   m_rl = rl  @  W_re_r                m_up = upd @ [W_ts_r | W_to_r]
  m_ps = jnp.dot(ps, w_ps_ref[...], preferred_element_type=f32)   # (TR, 2H)
  m_po = jnp.dot(po, w_po_ref[...], preferred_element_type=f32)   # (TR, 2H)
  m_rl = jnp.dot(rl, w_rr_ref[...], preferred_element_type=f32)   # (TR, H)

  # updated_rel_feat = rel_embed(cat([phrase[sub], phrase[obj], rel_feat], 1))
  upd = m_ps[:, :h_pad] + m_po[:, :h_pad] + m_rl + b_re_ref[...]
  upd_bf = upd.astype(bf16)
  m_up = jnp.dot(upd_bf, w_up_ref[...], preferred_element_type=f32)  # (TR, 2H)

  t_s = m_ps[:, h_pad:] + m_up[:, :h_pad] + b_ts_ref[...]
  t_o = m_po[:, h_pad:] + m_up[:, h_pad:] + b_to_ref[...]

  upd_rel_ref[...] = upd
  # atte = (trans_sub * trans_obj).sum(1) / sqrt(H); broadcast to 128 lanes so
  # the store is a full-width (unmasked) vst (review: lane-dense out_spec).
  atte = jnp.sum(t_s * t_o, axis=-1, keepdims=True) * inv_sqrt_h
  atte_ref[...] = jnp.broadcast_to(atte, atte_ref.shape)


# ----------------------------- kernel 2: phrase stage ------------------------


def phrase_kernel(am_ref, cm_ref, amt_ref, cmt_ref,
                  pproj_ref, phrase_ref, b_rp_ref, out_ref, *, eps):
  f32, bf16 = jnp.float32, jnp.bfloat16
  cm = cm_ref[...].astype(f32)           # connectivity masks stored as bf16
  cmt = cmt_ref[...].astype(f32)

  # dim=1 softmax of atte_map, and dim=1 softmax of atte_map^T (== dim=0 of
  # atte_map); the transposed map was built by the wrapper's swapped scatter.
  a_sub = _masked_softmax_rows(am_ref[...], cm, eps)        # (TP, P_pad)
  a_objt = _masked_softmax_rows(amt_ref[...], cmt, eps)     # (TP, P_pad)

  # rel2phr_trans(phr_context) = (a_sub + a_obj^T) @ (phrase @ W_rp) + b_rp
  # (W_rp folded into phrase_proj by the wrapper -> one MXU matmul per tile).
  w = (a_sub + a_objt).astype(bf16)
  rel2phr = (jnp.dot(w, pproj_ref[...], preferred_element_type=f32)
             + b_rp_ref[...])

  # involved <=> phrase appears as a subject (row conn) or an object (col conn)
  involved = (jnp.sum(cm, axis=-1, keepdims=True)
              + jnp.sum(cmt, axis=-1, keepdims=True)) > 0.0
  phrase = phrase_ref[...]
  out_ref[...] = jnp.where(involved, phrase + rel2phr, phrase)


# ----------------------------- wrapper ---------------------------------------


def word_phrase_graph_forward(word_feat, phrase_feat, rel_feat, rel_conn_mat,
                              word_to_graph_conn, params, eps=1e-6,
                              rel_tile=None, phr_tile=None):
  del word_to_graph_conn  # TODO(synk): declared by __init__, unused by forward
  f32, bf16 = jnp.float32, jnp.bfloat16
  P, H = phrase_feat.shape
  R = rel_conn_mat.shape[1]
  sub_idx = rel_conn_mat[0]
  obj_idx = rel_conn_mat[1]

  # padded extents: hidden on the 128-lane axis, rows on 16-sublane multiples,
  # and P_pad (lane axis of the (P,P) maps) independently rounded to x128.
  H_pad = _round_up(H, 128)
  R_pad = _round_up(max(R, 16), 16)
  P_pad = _round_up(max(P, 128), 128)

  # ---- per-generation VMEM budget & tile sizes -------------------------------
  vmem_cap = _vmem_capacity_bytes()
  small_vmem = vmem_cap <= 64 * 1024 * 1024                  # v7x-class core
  vmem_limit = (40 if small_vmem else 96) * 1024 * 1024
  base_tile = 256 if small_vmem else 512
  rel_tile = base_tile if rel_tile is None else rel_tile
  phr_tile = base_tile if phr_tile is None else phr_tile
  # cap tiles so double-buffered varying operands stay well under the limit
  k1_row = 2 * (3 * H_pad * 2 + H_pad * 4 + 128 * 4)
  k1_fix = 7 * H_pad * H_pad * 2 + 3 * H_pad * 4
  rel_tile = min(rel_tile, max(16, (vmem_limit // 2 - k1_fix) // k1_row))
  k2_row = 2 * (P_pad * (4 + 2) * 2 + 2 * H_pad * 4)
  k2_fix = 2 * P_pad * H_pad + H_pad * 4
  phr_tile = min(phr_tile, max(16, (vmem_limit // 2 - k2_fix) // k2_row))
  TR = _pick_tile(R_pad, rel_tile)
  TP = _pick_tile(P_pad, phr_tile)

  def pad2(a, rows, cols, dtype):
    a = a.astype(f32)
    a = jnp.pad(a, ((0, rows - a.shape[0]), (0, cols - a.shape[1])))
    return a.astype(dtype)

  # glue: gathers + one concatenated bf16 row stream for kernel 1 (1 DMA stream)
  ps = pad2(phrase_feat[sub_idx], R_pad, H_pad, bf16)
  po = pad2(phrase_feat[obj_idx], R_pad, H_pad, bf16)
  rl = pad2(rel_feat, R_pad, H_pad, bf16)
  pr = jnp.concatenate([ps, po, rl], axis=1)                # (R_pad, 3*H_pad)

  # split concatenated-input Linear weights; concatenate along the output (N)
  # axis per shared LHS so kernel-1 matmuls are 256 lanes wide.
  w_re, b_re = params['rel_embed']                          # (3H, H), (H,)
  w_ts, b_ts = params['rel2phr_trans_sub']                  # (2H, H), (H,)
  w_to, b_to = params['rel2phr_trans_obj']                  # (2H, H), (H,)
  w_rp, b_rp = params['rel2phr_trans']                      # (H, H),  (H,)
  wp = lambda w: pad2(w, H_pad, H_pad, bf16)
  bp = lambda b: pad2(b.reshape(1, H), 1, H_pad, f32)
  w_ps = jnp.concatenate([wp(w_re[:H]), wp(w_ts[:H])], axis=1)        # LHS ps
  w_po = jnp.concatenate([wp(w_re[H:2 * H]), wp(w_to[:H])], axis=1)   # LHS po
  w_rr = wp(w_re[2 * H:])                                             # LHS rl
  w_up = jnp.concatenate([wp(w_ts[H:]), wp(w_to[H:])], axis=1)        # LHS upd
  b_re_p, b_ts_p, b_to_p, b_rp_p = bp(b_re), bp(b_ts), bp(b_to), bp(b_rp)

  cparams = pltpu.CompilerParams(
      dimension_semantics=("parallel",), vmem_limit_bytes=int(vmem_limit))

  # ---- kernel 1: relation stage, tiled over R row-blocks ---------------------
  k1_cost = pl.CostEstimate(
      flops=int(2 * R_pad * H_pad * H_pad * 7),
      transcendentals=0,
      bytes_accessed=int(R_pad * 3 * H_pad * 2 + 7 * H_pad * H_pad * 2
                         + 3 * H_pad * 4 + R_pad * H_pad * 4 + R_pad * 128 * 4))

  def k1_call(single_buffer):
    inv = lambda s: _bspec(s, lambda i: (0, 0), single_buffer)
    var = lambda s: pl.BlockSpec(s, lambda i: (i, 0))
    return pl.pallas_call(
        functools.partial(rel_kernel, h_pad=H_pad,
                          inv_sqrt_h=1.0 / float(H) ** 0.5),
        grid=(R_pad // TR,),
        in_specs=[var((TR, 3 * H_pad)),
                  inv((H_pad, 2 * H_pad)), inv((H_pad, 2 * H_pad)),
                  inv((H_pad, H_pad)), inv((H_pad, 2 * H_pad)),
                  inv((1, H_pad)), inv((1, H_pad)), inv((1, H_pad))],
        out_specs=(var((TR, H_pad)), var((TR, 128))),
        out_shape=(jax.ShapeDtypeStruct((R_pad, H_pad), f32),
                   jax.ShapeDtypeStruct((R_pad, 128), f32)),
        compiler_params=cparams, cost_estimate=k1_cost,
    )(pr, w_ps, w_po, w_rr, w_up, b_re_p, b_ts_p, b_to_p)

  try:
    upd_rel_pad, atte_pad = k1_call(True)
  except Exception:   # pl.Buffered(1) not supported here: rerun double-buffered
    upd_rel_pad, atte_pad = k1_call(False)

  atte = atte_pad[:R, 0]

  # glue: scatter logits / connectivity into (P,P) maps. Transposed maps are
  # built directly with swapped-index scatters (no full (P,P) transpose pass);
  # connectivity masks are bf16 (exactly representable) to cut map HBM bytes.
  # TODO(synk): as in the reference numpy/torch index assignment, (sub, obj)
  # pairs are assumed unique; .set() with duplicates is implementation-defined.
  atte_map = jnp.zeros((P_pad, P_pad), f32).at[sub_idx, obj_idx].set(atte)
  atte_map_t = jnp.zeros((P_pad, P_pad), f32).at[obj_idx, sub_idx].set(atte)
  conn = jnp.zeros((P_pad, P_pad), bf16).at[sub_idx, obj_idx].set(1.0)
  conn_t = jnp.zeros((P_pad, P_pad), bf16).at[obj_idx, sub_idx].set(1.0)

  phrase_pad = pad2(phrase_feat, P_pad, H_pad, f32)
  # algebraic fold: rel2phr_trans(ctx) = (a_sub + a_obj^T) @ (phrase @ W) + b
  pproj_bf = pad2(phrase_feat @ w_rp, P_pad, H_pad, bf16)

  # ---- kernel 2: phrase stage, tiled over P row-blocks -----------------------
  k2_cost = pl.CostEstimate(
      flops=int(2 * P_pad * P_pad * H_pad + 10 * P_pad * P_pad),
      transcendentals=int(2 * P_pad * P_pad),
      bytes_accessed=int(2 * P_pad * P_pad * 4 + 2 * P_pad * P_pad * 2
                         + P_pad * H_pad * 2 + 2 * P_pad * H_pad * 4
                         + H_pad * 4))

  def k2_call(single_buffer):
    inv = lambda s: _bspec(s, lambda i: (0, 0), single_buffer)
    var = lambda s: pl.BlockSpec(s, lambda i: (i, 0))
    mp = var((TP, P_pad))
    return pl.pallas_call(
        functools.partial(phrase_kernel, eps=eps),
        grid=(P_pad // TP,),
        in_specs=[mp, mp, mp, mp,
                  inv((P_pad, H_pad)), var((TP, H_pad)), inv((1, H_pad))],
        out_specs=pl.BlockSpec((TP, H_pad), lambda i: (i, 0)),
        out_shape=jax.ShapeDtypeStruct((P_pad, H_pad), f32),
        compiler_params=cparams, cost_estimate=k2_cost,
    )(atte_map, conn, atte_map_t, conn_t, pproj_bf, phrase_pad, b_rp_p)

  try:
    out_phrase_pad = k2_call(True)
  except Exception:
    out_phrase_pad = k2_call(False)

  return word_feat, out_phrase_pad[:P, :H], upd_rel_pad[:R, :H]


# ----------------------------- params & reference ----------------------------


def init_params(key, hidden_dim):
  """Deterministic Linear-style init (uniform(-1/sqrt(fan_in), 1/sqrt(fan_in)))."""
  def lin(k, fan_in, fan_out):
    kw, kb = jax.random.split(k)
    bound = 1.0 / float(fan_in) ** 0.5
    w = jax.random.uniform(kw, (fan_in, fan_out), jnp.float32, -bound, bound)
    b = jax.random.uniform(kb, (fan_out,), jnp.float32, -bound, bound)
    return w, b

  ks = jax.random.split(key, 7)
  H = hidden_dim
  return {
      # declared by __init__ but unused by forward:
      'word2phr_w': lin(ks[0], H, H),
      'word2phr_p': lin(ks[1], H, H),
      'word2phr_trans': lin(ks[2], H, H),
      # used by forward:
      'rel_embed': lin(ks[3], 3 * H, H),
      'rel2phr_trans_sub': lin(ks[4], 2 * H, H),
      'rel2phr_trans_obj': lin(ks[5], 2 * H, H),
      'rel2phr_trans': lin(ks[6], H, H),   # cfg.MODEL.VG.JOINT_TRANS = False
  }


def reference_forward(word_feat, phrase_feat, rel_feat, rel_conn_mat, params,
                      eps=1e-6):
  """Pure-JAX f32 transcription of the PyTorch forward (validation only)."""
  P, H = phrase_feat.shape
  sub_idx, obj_idx = rel_conn_mat[0], rel_conn_mat[1]
  ps, po = phrase_feat[sub_idx], phrase_feat[obj_idx]

  w_re, b_re = params['rel_embed']
  w_ts, b_ts = params['rel2phr_trans_sub']
  w_to, b_to = params['rel2phr_trans_obj']
  w_rp, b_rp = params['rel2phr_trans']

  upd_rel = jnp.concatenate([ps, po, rel_feat], 1) @ w_re + b_re
  conn = jnp.zeros((P, P), jnp.float32).at[sub_idx, obj_idx].set(1.0)
  trans_sub = jnp.concatenate([ps, upd_rel], 1) @ w_ts + b_ts
  trans_obj = jnp.concatenate([po, upd_rel], 1) @ w_to + b_to
  atte = jnp.sum(trans_sub * trans_obj, axis=1) / (H ** 0.5)
  atte_map = jnp.zeros((P, P), jnp.float32).at[sub_idx, obj_idx].set(atte)

  def msm(vec, mask, axis):
    mv = vec * mask
    e = jnp.exp(mv - jnp.max(mv, axis=axis, keepdims=True)) * mask
    return e / (jnp.sum(e, axis=axis, keepdims=True) + eps)

  a_s, a_o = msm(atte_map, conn, 1), msm(atte_map, conn, 0)
  ctx = a_s @ phrase_feat + a_o.T @ phrase_feat
  involved = (jnp.zeros((P,), jnp.float32)
              .at[sub_idx].set(1.0).at[obj_idx].set(1.0))
  out_phrase = jnp.where(involved[:, None] > 0,
                         phrase_feat + (ctx @ w_rp + b_rp), phrase_feat)
  return word_feat, out_phrase, upd_rel


if __name__ == "__main__":
  key = jax.random.PRNGKey(0)
  H, P, R, W = 32, 16, 8, 12
  k_word, k_phr, k_rel, k_par = jax.random.split(key, 4)

  word_feat = jax.random.normal(k_word, (W, H), jnp.float32)
  phrase_feat = jax.random.normal(k_phr, (P, H), jnp.float32)
  rel_feat = jax.random.normal(k_rel, (R, H), jnp.float32)
  # unique (subject, object) pairs; phrase 15 is intentionally not involved
  sub_idx = jnp.array([0, 1, 2, 3, 5, 6, 9, 12], jnp.int32)
  obj_idx = jnp.array([4, 7, 8, 10, 11, 13, 14, 2], jnp.int32)
  rel_conn_mat = jnp.stack([sub_idx, obj_idx])          # (2, R)
  word_to_graph_conn = jnp.zeros((W,), jnp.int32)       # unused by forward

  params = init_params(k_par, H)

  out = word_phrase_graph_forward(word_feat, phrase_feat, rel_feat,
                                  rel_conn_mat, word_to_graph_conn, params)
  jax.block_until_ready(out)

  ref = reference_forward(word_feat, phrase_feat, rel_feat, rel_conn_mat, params)
  # bf16 MXU operands + approx reciprocal => looser tolerance than pure f32.
  for got, want in zip(out, ref):
    assert got.shape == want.shape and got.dtype == want.dtype
    assert jnp.allclose(got, want, atol=5e-2, rtol=5e-2), (
        float(jnp.max(jnp.abs(got - want))))

  print("KERNEL_OK")
</pallas_src>

<mosaic_0001>
module attributes {stable_mosaic.version = 11 : i64} {
  func.func @rel_kernel(%arg0: i32, %arg1: memref<16x384xbf16, #tpu.memory_space<vmem>>, %arg2: memref<128x256xbf16, #tpu.memory_space<vmem>>, %arg3: memref<128x256xbf16, #tpu.memory_space<vmem>>, %arg4: memref<128x128xbf16, #tpu.memory_space<vmem>>, %arg5: memref<128x256xbf16, #tpu.memory_space<vmem>>, %arg6: memref<1x128xf32, #tpu.memory_space<vmem>>, %arg7: memref<1x128xf32, #tpu.memory_space<vmem>>, %arg8: memref<1x128xf32, #tpu.memory_space<vmem>>, %arg9: memref<16x128xf32, #tpu.memory_space<vmem>>, %arg10: memref<16x128xf32, #tpu.memory_space<vmem>>) attributes {dimension_semantics = [#tpu.dimension_semantics<parallel>], iteration_bounds = array<i64: 1>, scalar_prefetch = 0 : i64, scratch_operands = 0 : i64, tpu.core_type = #tpu.core_type<tc>, window_params = [{transform_indices = @transform_0, window_bounds = array<i64: 16, 384>}, {pipeline_mode = #tpu.pipeline_mode<synchronous>, transform_indices = @transform_1, window_bounds = array<i64: 128, 256>}, {pipeline_mode = #tpu.pipeline_mode<synchronous>, transform_indices = @transform_2, window_bounds = array<i64: 128, 256>}, {pipeline_mode = #tpu.pipeline_mode<synchronous>, transform_indices = @transform_3, window_bounds = array<i64: 128, 128>}, {pipeline_mode = #tpu.pipeline_mode<synchronous>, transform_indices = @transform_4, window_bounds = array<i64: 128, 256>}, {pipeline_mode = #tpu.pipeline_mode<synchronous>, transform_indices = @transform_5, window_bounds = array<i64: 1, 128>}, {pipeline_mode = #tpu.pipeline_mode<synchronous>, transform_indices = @transform_6, window_bounds = array<i64: 1, 128>}, {pipeline_mode = #tpu.pipeline_mode<synchronous>, transform_indices = @transform_7, window_bounds = array<i64: 1, 128>}, {transform_indices = @transform_8, window_bounds = array<i64: 16, 128>}, {transform_indices = @transform_9, window_bounds = array<i64: 16, 128>}]} {
    %c0 = arith.constant 0 : index
    %c0_0 = arith.constant 0 : index
    %0 = vector.load %arg1[%c0, %c0_0] : memref<16x384xbf16, #tpu.memory_space<vmem>>, vector<16x384xbf16>
    %1 = vector.extract_strided_slice %0 {offsets = [0, 0], sizes = [16, 128], strides = [1, 1]} : vector<16x384xbf16> to vector<16x128xbf16>
    %2 = vector.extract_strided_slice %0 {offsets = [0, 128], sizes = [16, 128], strides = [1, 1]} : vector<16x384xbf16> to vector<16x128xbf16>
    %3 = vector.extract_strided_slice %0 {offsets = [0, 256], sizes = [16, 128], strides = [1, 1]} : vector<16x384xbf16> to vector<16x128xbf16>
    %c0_1 = arith.constant 0 : index
    %c0_2 = arith.constant 0 : index
    %4 = vector.load %arg2[%c0_1, %c0_2] : memref<128x256xbf16, #tpu.memory_space<vmem>>, vector<128x256xbf16>
    %cst = arith.constant dense<0.000000e+00> : vector<16x256xf32>
    %5 = tpu.matmul %1, %4, %cst {dimension_numbers = #tpu.dot_dimension_numbers<[1], [0], [0], [1], [0, 0, 1, 1], [], []>} : vector<16x128xbf16>, vector<128x256xbf16>, vector<16x256xf32> -> vector<16x256xf32>
    %c0_3 = arith.constant 0 : index
    %c0_4 = arith.constant 0 : index
    %6 = vector.load %arg3[%c0_3, %c0_4] : memref<128x256xbf16, #tpu.memory_space<vmem>>, vector<128x256xbf16>
    %cst_5 = arith.constant dense<0.000000e+00> : vector<16x256xf32>
    %7 = tpu.matmul %2, %6, %cst_5 {dimension_numbers = #tpu.dot_dimension_numbers<[1], [0], [0], [1], [0, 0, 1, 1], [], []>} : vector<16x128xbf16>, vector<128x256xbf16>, vector<16x256xf32> -> vector<16x256xf32>
    %c0_6 = arith.constant 0 : index
    %c0_7 = arith.constant 0 : index
    %8 = vector.load %arg4[%c0_6, %c0_7] : memref<128x128xbf16, #tpu.memory_space<vmem>>, vector<128x128xbf16>
    %cst_8 = arith.constant dense<0.000000e+00> : vector<16x128xf32>
    %9 = tpu.matmul %3, %8, %cst_8 {dimension_numbers = #tpu.dot_dimension_numbers<[1], [0], [0], [1], [0, 0, 1, 1], [], []>} : vector<16x128xbf16>, vector<128x128xbf16>, vector<16x128xf32> -> vector<16x128xf32>
    %10 = vector.extract_strided_slice %5 {offsets = [0, 0], sizes = [16, 128], strides = [1, 1]} : vector<16x256xf32> to vector<16x128xf32>
    %11 = vector.extract_strided_slice %7 {offsets = [0, 0], sizes = [16, 128], strides = [1, 1]} : vector<16x256xf32> to vector<16x128xf32>
    %12 = arith.addf %10, %11 : vector<16x128xf32>
    %13 = arith.addf %12, %9 : vector<16x128xf32>
    %c0_9 = arith.constant 0 : index
    %c0_10 = arith.constant 0 : index
    %14 = vector.load %arg6[%c0_9, %c0_10] : memref<1x128xf32, #tpu.memory_space<vmem>>, vector<1x128xf32>
    %15 = vector.broadcast %14 : vector<1x128xf32> to vector<16x128xf32>
    %16 = arith.addf %13, %15 : vector<16x128xf32>
    %17 = arith.truncf %16 : vector<16x128xf32> to vector<16x128xbf16>
    %c0_11 = arith.constant 0 : index
    %c0_12 = arith.constant 0 : index
    %18 = vector.load %arg5[%c0_11, %c0_12] : memref<128x256xbf16, #tpu.memory_space<vmem>>, vector<128x256xbf16>
    %cst_13 = arith.constant dense<0.000000e+00> : vector<16x256xf32>
    %19 = tpu.matmul %17, %18, %cst_13 {dimension_numbers = #tpu.dot_dimension_numbers<[1], [0], [0], [1], [0, 0, 1, 1], [], []>} : vector<16x128xbf16>, vector<128x256xbf16>, vector<16x256xf32> -> vector<16x256xf32>
    %20 = vector.extract_strided_slice %5 {offsets = [0, 128], sizes = [16, 128], strides = [1, 1]} : vector<16x256xf32> to vector<16x128xf32>
    %21 = vector.extract_strided_slice %19 {offsets = [0, 0], sizes = [16, 128], strides = [1, 1]} : vector<16x256xf32> to vector<16x128xf32>
    %22 = arith.addf %20, %21 : vector<16x128xf32>
    %c0_14 = arith.constant 0 : index
    %c0_15 = arith.constant 0 : index
    %23 = vector.load %arg7[%c0_14, %c0_15] : memref<1x128xf32, #tpu.memory_space<vmem>>, vector<1x128xf32>
    %24 = vector.broadcast %23 : vector<1x128xf32> to vector<16x128xf32>
    %25 = arith.addf %22, %24 : vector<16x128xf32>
    %26 = vector.extract_strided_slice %7 {offsets = [0, 128], sizes = [16, 128], strides = [1, 1]} : vector<16x256xf32> to vector<16x128xf32>
    %27 = vector.extract_strided_slice %19 {offsets = [0, 128], sizes = [16, 128], strides = [1, 1]} : vector<16x256xf32> to vector<16x128xf32>
    %28 = arith.addf %26, %27 : vector<16x128xf32>
    %c0_16 = arith.constant 0 : index
    %c0_17 = arith.constant 0 : index
    %29 = vector.load %arg8[%c0_16, %c0_17] : memref<1x128xf32, #tpu.memory_space<vmem>>, vector<1x128xf32>
    %30 = vector.broadcast %29 : vector<1x128xf32> to vector<16x128xf32>
    %31 = arith.addf %28, %30 : vector<16x128xf32>
    %c0_18 = arith.constant 0 : index
    %c0_19 = arith.constant 0 : index
    %32 = vector.load %arg9[%c0_18, %c0_19] : memref<16x128xf32, #tpu.memory_space<vmem>>, vector<16x128xf32>
    tpu.vector_store %arg9[%c0_18, %c0_19], %16 {strides = array<i32>} : memref<16x128xf32, #tpu.memory_space<vmem>>, vector<16x128xf32>,
    %33 = arith.mulf %25, %31 : vector<16x128xf32>
    %cst_20 = arith.constant dense<0.000000e+00> : vector<16xf32>
    %34 = vector.multi_reduction <add>, %33, %cst_20 [1] : vector<16x128xf32> to vector<16xf32>
    %35 = vector.shape_cast %34 : vector<16xf32> to vector<16x1xf32>
    %cst_21 = arith.constant 0.176776692 : f32
    %36 = vector.broadcast %cst_21 : f32 to vector<16x1xf32>
    %37 = arith.mulf %35, %36 : vector<16x1xf32>
    %38 = vector.shape_cast %37 : vector<16x1xf32> to vector<16x1xf32>
    %39 = vector.broadcast %38 : vector<16x1xf32> to vector<16x128xf32>
    %c0_22 = arith.constant 0 : index
    %c0_23 = arith.constant 0 : index
    %40 = vector.load %arg10[%c0_22, %c0_23] : memref<16x128xf32, #tpu.memory_space<vmem>>, vector<16x128xf32>
    tpu.vector_store %arg10[%c0_22, %c0_23], %39 {strides = array<i32>} : memref<16x128xf32, #tpu.memory_space<vmem>>, vector<16x128xf32>,
    return
  }
  func.func @transform_0(%arg0: i32) -> (i32, i32) {
    %c0_i32 = arith.constant 0 : i32
    %c0_i32_0 = arith.constant 0 : i32
    return %arg0, %c0_i32 : i32, i32
  }
  func.func @transform_1(%arg0: i32) -> (i32, i32) {
    %c0_i32 = arith.constant 0 : i32
    %c0_i32_0 = arith.constant 0 : i32
    %c0_i32_1 = arith.constant 0 : i32
    return %c0_i32, %c0_i32_0 : i32, i32
  }
  func.func @transform_2(%arg0: i32) -> (i32, i32) {
    %c0_i32 = arith.constant 0 : i32
    %c0_i32_0 = arith.constant 0 : i32
    %c0_i32_1 = arith.constant 0 : i32
    return %c0_i32, %c0_i32_0 : i32, i32
  }
  func.func @transform_3(%arg0: i32) -> (i32, i32) {
    %c0_i32 = arith.constant 0 : i32
    %c0_i32_0 = arith.constant 0 : i32
    %c0_i32_1 = arith.constant 0 : i32
    return %c0_i32, %c0_i32_0 : i32, i32
  }
  func.func @transform_4(%arg0: i32) -> (i32, i32) {
    %c0_i32 = arith.constant 0 : i32
    %c0_i32_0 = arith.constant 0 : i32
    %c0_i32_1 = arith.constant 0 : i32
    return %c0_i32, %c0_i32_0 : i32, i32
  }
  func.func @transform_5(%arg0: i32) -> (i32, i32) {
    %c0_i32 = arith.constant 0 : i32
    %c0_i32_0 = arith.constant 0 : i32
    %c0_i32_1 = arith.constant 0 : i32
    return %c0_i32, %c0_i32_0 : i32, i32
  }
  func.func @transform_6(%arg0: i32) -> (i32, i32) {
    %c0_i32 = arith.constant 0 : i32
    %c0_i32_0 = arith.constant 0 : i32
    %c0_i32_1 = arith.constant 0 : i32
    return %c0_i32, %c0_i32_0 : i32, i32
  }
  func.func @transform_7(%arg0: i32) -> (i32, i32) {
    %c0_i32 = arith.constant 0 : i32
    %c0_i32_0 = arith.constant 0 : i32
    %c0_i32_1 = arith.constant 0 : i32
    return %c0_i32, %c0_i32_0 : i32, i32
  }
  func.func @transform_8(%arg0: i32) -> (i32, i32) {
    %c0_i32 = arith.constant 0 : i32
    %c0_i32_0 = arith.constant 0 : i32
    return %arg0, %c0_i32 : i32, i32
  }
  func.func @transform_9(%arg0: i32) -> (i32, i32) {
    %c0_i32 = arith.constant 0 : i32
    %c0_i32_0 = arith.constant 0 : i32
    return %arg0, %c0_i32 : i32, i32
  }
}

module attributes {stable_mosaic.version = 11 : i64} {
  func.func @rel_kernel(%arg0: i32, %arg1: memref<16x384xbf16, #tpu.memory_space<vmem>>, %arg2: memref<128x256xbf16, #tpu.memory_space<vmem>>, %arg3: memref<128x256xbf16, #tpu.memory_space<vmem>>, %arg4: memref<128x128xbf16, #tpu.memory_space<vmem>>, %arg5: memref<128x256xbf16, #tpu.memory_space<vmem>>, %arg6: memref<1x128xf32, #tpu.memory_space<vmem>>, %arg7: memref<1x128xf32, #tpu.memory_space<vmem>>, %arg8: memref<1x128xf32, #tpu.memory_space<vmem>>, %arg9: memref<16x128xf32, #tpu.memory_space<vmem>>, %arg10: memref<16x128xf32, #tpu.memory_space<vmem>>) attributes {dimension_semantics = [#tpu.dimension_semantics<parallel>], iteration_bounds = array<i64: 1>, scalar_prefetch = 0 : i64, scratch_operands = 0 : i64, tpu.core_type = #tpu.core_type<tc>, window_params = [{transform_indices = @transform_0, window_bounds = array<i64: 16, 384>}, {pipeline_mode = #tpu.pipeline_mode<synchronous>, transform_indices = @transform_1, window_bounds = array<i64: 128, 256>}, {pipeline_mode = #tpu.pipeline_mode<synchronous>, transform_indices = @transform_2, window_bounds = array<i64: 128, 256>}, {pipeline_mode = #tpu.pipeline_mode<synchronous>, transform_indices = @transform_3, window_bounds = array<i64: 128, 128>}, {pipeline_mode = #tpu.pipeline_mode<synchronous>, transform_indices = @transform_4, window_bounds = array<i64: 128, 256>}, {pipeline_mode = #tpu.pipeline_mode<synchronous>, transform_indices = @transform_5, window_bounds = array<i64: 1, 128>}, {pipeline_mode = #tpu.pipeline_mode<synchronous>, transform_indices = @transform_6, window_bounds = array<i64: 1, 128>}, {pipeline_mode = #tpu.pipeline_mode<synchronous>, transform_indices = @transform_7, window_bounds = array<i64: 1, 128>}, {transform_indices = @transform_8, window_bounds = array<i64: 16, 128>}, {transform_indices = @transform_9, window_bounds = array<i64: 16, 128>}]} {
    %c0 = arith.constant 0 : index
    %c0_0 = arith.constant 0 : index
    %0 = vector.load %arg1[%c0, %c0_0] : memref<16x384xbf16, #tpu.memory_space<vmem>>, vector<16x384xbf16>
    %1 = vector.extract_strided_slice %0 {offsets = [0, 0], sizes = [16, 128], strides = [1, 1]} : vector<16x384xbf16> to vector<16x128xbf16>
    %2 = vector.extract_strided_slice %0 {offsets = [0, 128], sizes = [16, 128], strides = [1, 1]} : vector<16x384xbf16> to vector<16x128xbf16>
    %3 = vector.extract_strided_slice %0 {offsets = [0, 256], sizes = [16, 128], strides = [1, 1]} : vector<16x384xbf16> to vector<16x128xbf16>
    %c0_1 = arith.constant 0 : index
    %c0_2 = arith.constant 0 : index
    %4 = vector.load %arg2[%c0_1, %c0_2] : memref<128x256xbf16, #tpu.memory_space<vmem>>, vector<128x256xbf16>
    %cst = arith.constant dense<0.000000e+00> : vector<16x256xf32>
    %5 = tpu.matmul %1, %4, %cst {dimension_numbers = #tpu.dot_dimension_numbers<[1], [0], [0], [1], [0, 0, 1, 1], [], []>} : vector<16x128xbf16>, vector<128x256xbf16>, vector<16x256xf32> -> vector<16x256xf32>
    %c0_3 = arith.constant 0 : index
    %c0_4 = arith.constant 0 : index
    %6 = vector.load %arg3[%c0_3, %c0_4] : memref<128x256xbf16, #tpu.memory_space<vmem>>, vector<128x256xbf16>
    %cst_5 = arith.constant dense<0.000000e+00> : vector<16x256xf32>
    %7 = tpu.matmul %2, %6, %cst_5 {dimension_numbers = #tpu.dot_dimension_numbers<[1], [0], [0], [1], [0, 0, 1, 1], [], []>} : vector<16x128xbf16>, vector<128x256xbf16>, vector<16x256xf32> -> vector<16x256xf32>
    %c0_6 = arith.constant 0 : index
    %c0_7 = arith.constant 0 : index
    %8 = vector.load %arg4[%c0_6, %c0_7] : memref<128x128xbf16, #tpu.memory_space<vmem>>, vector<128x128xbf16>
    %cst_8 = arith.constant dense<0.000000e+00> : vector<16x128xf32>
    %9 = tpu.matmul %3, %8, %cst_8 {dimension_numbers = #tpu.dot_dimension_numbers<[1], [0], [0], [1], [0, 0, 1, 1], [], []>} : vector<16x128xbf16>, vector<128x128xbf16>, vector<16x128xf32> -> vector<16x128xf32>
    %10 = vector.extract_strided_slice %5 {offsets = [0, 0], sizes = [16, 128], strides = [1, 1]} : vector<16x256xf32> to vector<16x128xf32>
    %11 = vector.extract_strided_slice %7 {offsets = [0, 0], sizes = [16, 128], strides = [1, 1]} : vector<16x256xf32> to vector<16x128xf32>
    %12 = arith.addf %10, %11 : vector<16x128xf32>
    %13 = arith.addf %12, %9 : vector<16x128xf32>
    %c0_9 = arith.constant 0 : index
    %c0_10 = arith.constant 0 : index
    %14 = vector.load %arg6[%c0_9, %c0_10] : memref<1x128xf32, #tpu.memory_space<vmem>>, vector<1x128xf32>
    %15 = vector.broadcast %14 : vector<1x128xf32> to vector<16x128xf32>
    %16 = arith.addf %13, %15 : vector<16x128xf32>
    %17 = arith.truncf %16 : vector<16x128xf32> to vector<16x128xbf16>
    %c0_11 = arith.constant 0 : index
    %c0_12 = arith.constant 0 : index
    %18 = vector.load %arg5[%c0_11, %c0_12] : memref<128x256xbf16, #tpu.memory_space<vmem>>, vector<128x256xbf16>
    %cst_13 = arith.constant dense<0.000000e+00> : vector<16x256xf32>
    %19 = tpu.matmul %17, %18, %cst_13 {dimension_numbers = #tpu.dot_dimension_numbers<[1], [0], [0], [1], [0, 0, 1, 1], [], []>} : vector<16x128xbf16>, vector<128x256xbf16>, vector<16x256xf32> -> vector<16x256xf32>
    %20 = vector.extract_strided_slice %5 {offsets = [0, 128], sizes = [16, 128], strides = [1, 1]} : vector<16x256xf32> to vector<16x128xf32>
    %21 = vector.extract_strided_slice %19 {offsets = [0, 0], sizes = [16, 128], strides = [1, 1]} : vector<16x256xf32> to vector<16x128xf32>
    %22 = arith.addf %20, %21 : vector<16x128xf32>
    %c0_14 = arith.constant 0 : index
    %c0_15 = arith.constant 0 : index
    %23 = vector.load %arg7[%c0_14, %c0_15] : memref<1x128xf32, #tpu.memory_space<vmem>>, vector<1x128xf32>
    %24 = vector.broadcast %23 : vector<1x128xf32> to vector<16x128xf32>
    %25 = arith.addf %22, %24 : vector<16x128xf32>
    %26 = vector.extract_strided_slice %7 {offsets = [0, 128], sizes = [16, 128], strides = [1, 1]} : vector<16x256xf32> to vector<16x128xf32>
    %27 = vector.extract_strided_slice %19 {offsets = [0, 128], sizes = [16, 128], strides = [1, 1]} : vector<16x256xf32> to vector<16x128xf32>
    %28 = arith.addf %26, %27 : vector<16x128xf32>
    %c0_16 = arith.constant 0 : index
    %c0_17 = arith.constant 0 : index
    %29 = vector.load %arg8[%c0_16, %c0_17] : memref<1x128xf32, #tpu.memory_space<vmem>>, vector<1x128xf32>
    %30 = vector.broadcast %29 : vector<1x128xf32> to vector<16x128xf32>
    %31 = arith.addf %28, %30 : vector<16x128xf32>
    %c0_18 = arith.constant 0 : index
    %c0_19 = arith.constant 0 : index
    %32 = vector.load %arg9[%c0_18, %c0_19] : memref<16x128xf32, #tpu.memory_space<vmem>>, vector<16x128xf32>
    tpu.vector_store %arg9[%c0_18, %c0_19], %16 {strides = array<i32>} : memref<16x128xf32, #tpu.memory_space<vmem>>, vector<16x128xf32>,
    %33 = arith.mulf %25, %31 : vector<16x128xf32>
    %cst_20 = arith.constant dense<0.000000e+00> : vector<16xf32>
    %34 = vector.multi_reduction <add>, %33, %cst_20 [1] : vector<16x128xf32> to vector<16xf32>
    %35 = vector.shape_cast %34 : vector<16xf32> to vector<16x1xf32>
    %cst_21 = arith.constant 0.176776692 : f32
    %36 = vector.broadcast %cst_21 : f32 to vector<16x1xf32>
    %37 = arith.mulf %35, %36 : vector<16x1xf32>
    %38 = vector.shape_cast %37 : vector<16x1xf32> to vector<16x1xf32>
    %39 = vector.broadcast %38 : vector<16x1xf32> to vector<16x128xf32>
    %c0_22 = arith.constant 0 : index
    %c0_23 = arith.constant 0 : index
    %40 = vector.load %arg10[%c0_22, %c0_23] : memref<16x128xf32, #tpu.memory_space<vmem>>, vector<16x128xf32>
    tpu.vector_store %arg10[%c0_22, %c0_23], %39 {strides = array<i32>} : memref<16x128xf32, #tpu.memory_space<vmem>>, vector<16x128xf32>,
    return
  }
  func.func @transform_0(%arg0: i32) -> (i32, i32) {
    %c0_i32 = arith.constant 0 : i32
    %c0_i32_0 = arith.constant 0 : i32
    return %arg0, %c0_i32 : i32, i32
  }
  func.func @transform_1(%arg0: i32) -> (i32, i32) {
    %c0_i32 = arith.constant 0 : i32
    %c0_i32_0 = arith.constant 0 : i32
    %c0_i32_1 = arith.constant 0 : i32
    return %c0_i32, %c0_i32_0 : i32, i32
  }
  func.func @transform_2(%arg0: i32) -> (i32, i32) {
    %c0_i32 = arith.constant 0 : i32
    %c0_i32_0 = arith.constant 0 : i32
    %c0_i32_1 = arith.constant 0 : i32
    return %c0_i32, %c0_i32_0 : i32, i32
  }
  func.func @transform_3(%arg0: i32) -> (i32, i32) {
    %c0_i32 = arith.constant 0 : i32
    %c0_i32_0 = arith.constant 0 : i32
    %c0_i32_1 = arith.constant 0 : i32
    return %c0_i32, %c0_i32_0 : i32, i32
  }
  func.func @transform_4(%arg0: i32) -> (i32, i32) {
    %c0_i32 = arith.constant 0 : i32
    %c0_i32_0 = arith.constant 0 : i32
    %c0_i32_1 = arith.constant 0 : i32
    return %c0_i32, %c0_i32_0 : i32, i32
  }
  func.func @transform_5(%arg0: i32) -> (i32, i32) {
    %c0_i32 = arith.constant 0 : i32
    %c0_i32_0 = arith.constant 0 : i32
    %c0_i32_1 = arith.constant 0 : i32
    return %c0_i32, %c0_i32_0 : i32, i32
  }
  func.func @transform_6(%arg0: i32) -> (i32, i32) {
    %c0_i32 = arith.constant 0 : i32
    %c0_i32_0 = arith.constant 0 : i32
    %c0_i32_1 = arith.constant 0 : i32
    return %c0_i32, %c0_i32_0 : i32, i32
  }
  func.func @transform_7(%arg0: i32) -> (i32, i32) {
    %c0_i32 = arith.constant 0 : i32
    %c0_i32_0 = arith.constant 0 : i32
    %c0_i32_1 = arith.constant 0 : i32
    return %c0_i32, %c0_i32_0 : i32, i32
  }
  func.func @transform_8(%arg0: i32) -> (i32, i32) {
    %c0_i32 = arith.constant 0 : i32
    %c0_i32_0 = arith.constant 0 : i32
    return %arg0, %c0_i32 : i32, i32
  }
  func.func @transform_9(%arg0: i32) -> (i32, i32) {
    %c0_i32 = arith.constant 0 : i32
    %c0_i32_0 = arith.constant 0 : i32
    return %arg0, %c0_i32 : i32, i32
  }
}

</mosaic_0001>

<llo_original>
// kernel: tpu_custom_call.1
$region0: #{tpu_custom_call.1}
  #allocation0 [shape = 'u32[]', space=smem, size = 0x4, offset = 0x4, fixed_abs, tag = 'smem constant byte address 0x4 - core index']
  #allocation1 [shape = 'u32[72,128]{1,0:T(1,128)}', space=vmem, size = 0x9000, scoped, tag = 'internal scratch']
  %s0 = inlined_call_operand.hbm [shape: bf16[16,384], index: 0, kind: input, shape index: {}]
  %s1 = inlined_call_operand.hbm [shape: bf16[128,256], index: 1, kind: input, shape index: {}]
  %s2 = inlined_call_operand.hbm [shape: bf16[128,256], index: 2, kind: input, shape index: {}]
  %s3 = inlined_call_operand.hbm [shape: bf16[128,128], index: 3, kind: input, shape index: {}]
  %s4 = inlined_call_operand.hbm [shape: bf16[128,256], index: 4, kind: input, shape index: {}]
  %s5 = inlined_call_operand.vmem [shape: f32[1,128], index: 5, kind: input, shape index: {}]
  %s6 = inlined_call_operand.vmem [shape: f32[1,128], index: 6, kind: input, shape index: {}]
  %s7 = inlined_call_operand.vmem [shape: f32[1,128], index: 7, kind: input, shape index: {}]
  %s8 = inlined_call_operand.hbm [shape: f32[16,128], index: 8, kind: output, shape index: {0}]
  %s9 = inlined_call_operand.hbm [shape: f32[16,128], index: 9, kind: output, shape index: {1}]
  %10 = xla_tuple %s8, %s9
  %s11 = sld [smem:[#allocation0]]
  $region70: #{tpu_custom_call.1} parent=0
    _
  %s13 = ssub.s32 1, %s11
  %s14 = scalar_select 0, %s13, %s11
  $region1: #{tpu_custom_call.1} parent=0
    #allocation2 [shape = 'u8[12288]{0}', space=vmem, size = 0x3000, scoped, tag = 'input window, operand 0, single buffered']
    #allocation3 [shape = 's32[1]{0}', space=sflag, size = 0x4, scoped, tag = 'scoped memory for tpu_custom_call.1']
    #allocation4 [shape = 's32[1]{0}', space=sflag, size = 0x4, scoped, tag = 'scoped memory for tpu_custom_call.1']
    #allocation5 [shape = 'u8[65536]{0}', space=vmem, size = 0x10000, scoped, tag = 'input window, operand 1, single buffered']
    #allocation6 [shape = 's32[1]{0}', space=sflag, size = 0x4, scoped, tag = 'scoped memory for tpu_custom_call.1']
    #allocation7 [shape = 'u8[65536]{0}', space=vmem, size = 0x10000, scoped, tag = 'input window, operand 2, single buffered']
    #allocation8 [shape = 'u8[32768]{0}', space=vmem, size = 0x8000, scoped, tag = 'input window, operand 3, single buffered']
    #allocation9 [shape = 's32[1]{0}', space=sflag, size = 0x4, scoped, tag = 'scoped memory for tpu_custom_call.1']
    #allocation10 [shape = 'u8[65536]{0}', space=vmem, size = 0x10000, scoped, tag = 'input window, operand 4, single buffered']
    #allocation11 [shape = 'u8[8192]{0}', space=vmem, size = 0x2000, scoped, tag = 'output window, operand 0, single buffered']
    #allocation12 [shape = 'u8[8192]{0}', space=vmem, size = 0x2000, scoped, tag = 'output window, operand 1, single buffered']
    #allocation13 [shape = 's32[1]{0}', space=sflag, size = 0x4, scoped, tag = 'scoped memory for tpu_custom_call.1']
    %15 = vsyncpa [#allocation3], 0
    %16 = vsyncpa [#allocation6], 0
    %17 = vsyncpa [#allocation9], 0
    %18 = vsyncpa [#allocation4], 0
    %19 = vsyncpa [#allocation13], 0
    // Predicated region
    $region2: #{tpu_custom_call.1} parent=1 // pred_check
      _
    $region3: #{tpu_custom_call.1} parent=1 // pred_check_branch
      %21 = sbr.rel (0) target = $region5
    $region4: #{tpu_custom_call.1} parent=1 // pred_region
      %23 = vsyncadd [#allocation3], 0
      %s24 = sshll.u32 %s0, 4
      %s25 = int_to_ptr.hbm [resolvable:$true] %s24
      %s26 = sshll.u32 [#allocation2], 4
      %s27 = int_to_ptr.vmem [resolvable:$true] %s26
      %32 = dma.hbm_to_vmem [thread:$0]  %s25, 384, %s27, [#allocation3], 192, 192, 12
    $region5: #{tpu_custom_call.1} parent=1 // pred_fallthru
      _
    // Predicated region
    $region6: #{tpu_custom_call.1} parent=1 // pred_check
      _
    $region7: #{tpu_custom_call.1} parent=1 // pred_check_branch
      %34 = sbr.rel (0) target = $region9
    $region8: #{tpu_custom_call.1} parent=1 // pred_region
      %36 = vsyncadd [#allocation6], 0
      %s37 = sshll.u32 %s1, 4
      %s38 = int_to_ptr.hbm [resolvable:$true] %s37
      %s39 = sshll.u32 [#allocation5], 4
      %s40 = int_to_ptr.vmem [resolvable:$true] %s39
      %45 = dma.hbm_to_vmem [thread:$0]  %s38, 2048, %s40, [#allocation6], 128, 128, 8
    $region9: #{tpu_custom_call.1} parent=1 // pred_fallthru
      _
    // Predicated region
    $region10: #{tpu_custom_call.1} parent=1 // pred_check
      _
    $region11: #{tpu_custom_call.1} parent=1 // pred_check_branch
      %47 = sbr.rel (0) target = $region13
    $region12: #{tpu_custom_call.1} parent=1 // pred_region
      %49 = vsyncadd [#allocation6], 0
      %s50 = sshll.u32 %s2, 4
      %s51 = int_to_ptr.hbm [resolvable:$true] %s50
      %s52 = sshll.u32 [#allocation7], 4
      %s53 = int_to_ptr.vmem [resolvable:$true] %s52
      %58 = dma.hbm_to_vmem [thread:$0]  %s51, 2048, %s53, [#allocation6], 128, 128, 8
    $region13: #{tpu_custom_call.1} parent=1 // pred_fallthru
      _
    // Predicated region
    $region14: #{tpu_custom_call.1} parent=1 // pred_check
      _
    $region15: #{tpu_custom_call.1} parent=1 // pred_check_branch
      %60 = sbr.rel (0) target = $region17
    $region16: #{tpu_custom_call.1} parent=1 // pred_region
      %62 = vsyncadd [#allocation9], 0
      %s63 = sshll.u32 %s3, 4
      %s64 = int_to_ptr.hbm [resolvable:$true] %s63
      %s65 = sshll.u32 [#allocation8], 4
      %s66 = int_to_ptr.vmem [resolvable:$true] %s65
      %71 = dma.hbm_to_vmem [thread:$0]  %s64, 1024, %s66, [#allocation9], 64, 64, 4
    $region17: #{tpu_custom_call.1} parent=1 // pred_fallthru
      _
    // Predicated region
    $region18: #{tpu_custom_call.1} parent=1 // pred_check
      _
    $region19: #{tpu_custom_call.1} parent=1 // pred_check_branch
      %73 = sbr.rel (0) target = $region21
    $region20: #{tpu_custom_call.1} parent=1 // pred_region
      %75 = vsyncadd [#allocation9], 0
      %s76 = sshll.u32 %s4, 4
      %s77 = int_to_ptr.hbm [resolvable:$true] %s76
      %s78 = sshll.u32 [#allocation10], 4
      %s79 = int_to_ptr.vmem [resolvable:$true] %s78
      %84 = dma.hbm_to_vmem [thread:$0]  %s77, 2048, %s79, [#allocation9], 128, 128, 8
    $region21: #{tpu_custom_call.1} parent=1 // pred_fallthru
      _
    // Predicated region
    $region22: #{tpu_custom_call.1} parent=1 // pred_check
      _
    $region23: #{tpu_custom_call.1} parent=1 // pred_check_branch
      %86 = sbr.rel (0) target = $region25
    $region24: #{tpu_custom_call.1} parent=1 // pred_region
      _
    $region25: #{tpu_custom_call.1} parent=1 // pred_fallthru
      _
    // Predicated region
    $region26: #{tpu_custom_call.1} parent=1 // pred_check
      _
    $region27: #{tpu_custom_call.1} parent=1 // pred_check_branch
      %88 = sbr.rel (0) target = $region29
    $region28: #{tpu_custom_call.1} parent=1 // pred_region
      _
    $region29: #{tpu_custom_call.1} parent=1 // pred_fallthru
      _
    // Predicated region
    $region30: #{tpu_custom_call.1} parent=1 // pred_check
      _
    $region31: #{tpu_custom_call.1} parent=1 // pred_check_branch
      %90 = sbr.rel (0) target = $region33
    $region32: #{tpu_custom_call.1} parent=1 // pred_region
      _
    $region33: #{tpu_custom_call.1} parent=1 // pred_fallthru
      _
    // Predicated region
    $region34: #{tpu_custom_call.1} parent=1 // pred_check
      _
    $region35: #{tpu_custom_call.1} parent=1 // pred_check_branch
      %92 = sbr.rel (0) target = $region37
    $region36: #{tpu_custom_call.1} parent=1 // pred_region
      %94 = dma.done [#allocation3], 384
    $region37: #{tpu_custom_call.1} parent=1 // pred_fallthru
      _
    // Predicated region
    $region38: #{tpu_custom_call.1} parent=1 // pred_check
      _
    $region39: #{tpu_custom_call.1} parent=1 // pred_check_branch
      %96 = sbr.rel (0) target = $region41
    $region40: #{tpu_custom_call.1} parent=1 // pred_region
      %98 = dma.done [#allocation6], 2048
    $region41: #{tpu_custom_call.1} parent=1 // pred_fallthru
      _
    // Predicated region
    $region42: #{tpu_custom_call.1} parent=1 // pred_check
      _
    $region43: #{tpu_custom_call.1} parent=1 // pred_check_branch
      %100 = sbr.rel (0) target = $region45
    $region44: #{tpu_custom_call.1} parent=1 // pred_region
      %102 = dma.done [#allocation6], 2048
    $region45: #{tpu_custom_call.1} parent=1 // pred_fallthru
      _
    // Predicated region
    $region46: #{tpu_custom_call.1} parent=1 // pred_check
      _
    $region47: #{tpu_custom_call.1} parent=1 // pred_check_branch
      %104 = sbr.rel (0) target = $region49
    $region48: #{tpu_custom_call.1} parent=1 // pred_region
      %106 = dma.done [#allocation9], 1024
    $region49: #{tpu_custom_call.1} parent=1 // pred_fallthru
      _
    // Predicated region
    $region50: #{tpu_custom_call.1} parent=1 // pred_check
      _
    $region51: #{tpu_custom_call.1} parent=1 // pred_check_branch
      %108 = sbr.rel (0) target = $region53
    $region52: #{tpu_custom_call.1} parent=1 // pred_region
      %110 = dma.done [#allocation9], 2048
    $region53: #{tpu_custom_call.1} parent=1 // pred_fallthru
      _
    %v111 = vld [vmem:[#allocation2] sm:$0xff]
    %v112 = vld [vmem:[#allocation2 + $0x8] sm:$0xf]
    %v113 = vld [vmem:[#allocation2 + $0xc] sm:$0xff]
    %v114 = vld [vmem:[#allocation2 + $0x14] sm:$0xf]
    %v115 = vld [vmem:[#allocation5] sm:$0xff]
    %v116 = vld [vmem:[#allocation5 + $0x8] sm:$0xff]
    %v117 = vld [vmem:[#allocation5 + $0x10] sm:$0xff]
    %v118 = vld [vmem:[#allocation5 + $0x18] sm:$0xff]
    %v119 = vld [vmem:[#allocation5 + $0x20] sm:$0xff]
    %v120 = vld [vmem:[#allocation5 + $0x28] sm:$0xff]
    %v121 = vld [vmem:[#allocation5 + $0x30] sm:$0xff]
    %v122 = vld [vmem:[#allocation5 + $0x38] sm:$0xff]
    %v123 = vld [vmem:[#allocation5 + $0x40] sm:$0xff]
    %v124 = vld [vmem:[#allocation5 + $0x48] sm:$0xff]
    %v125 = vld [vmem:[#allocation5 + $0x50] sm:$0xff]
    %v126 = vld [vmem:[#allocation5 + $0x58] sm:$0xff]
    %v127 = vld [vmem:[#allocation5 + $0x60] sm:$0xff]
    %v128 = vld [vmem:[#allocation5 + $0x68] sm:$0xff]
    %v129 = vld [vmem:[#allocation5 + $0x70] sm:$0xff]
    %v130 = vld [vmem:[#allocation5 + $0x78] sm:$0xff]
    %v133 = vunpack.c.l.b16 %v111
    %v134 = vunpack.c.l.b16 %v113
    %v135 = vpack.c.b16 %v134, %v133
    %v153 = vunpack.c.l.b16 %v115
    %v154 = vunpack.c.h.b16 %v115
    %v155 = vunpack.c.l.b16 %v116
    %v156 = vunpack.c.h.b16 %v116
    %v157 = vunpack.c.l.b16 %v117
    %v158 = vunpack.c.h.b16 %v117
    %v159 = vunpack.c.l.b16 %v118
    %v160 = vunpack.c.h.b16 %v118
    %v161 = vunpack.c.l.b16 %v119
    %v162 = vunpack.c.h.b16 %v119
    %v163 = vunpack.c.l.b16 %v120
    %v164 = vunpack.c.h.b16 %v120
    %v165 = vunpack.c.l.b16 %v121
    %v166 = vunpack.c.h.b16 %v121
    %v167 = vunpack.c.l.b16 %v122
    %v168 = vunpack.c.h.b16 %v122
    %v169 = vunpack.c.l.b16 %v123
    %v170 = vunpack.c.h.b16 %v123
    %v171 = vunpack.c.l.b16 %v124
    %v172 = vunpack.c.h.b16 %v124
    %v173 = vunpack.c.l.b16 %v125
    %v174 = vunpack.c.h.b16 %v125
    %v175 = vunpack.c.l.b16 %v126
    %v176 = vunpack.c.h.b16 %v126
    %v177 = vunpack.c.l.b16 %v127
    %v178 = vunpack.c.h.b16 %v127
    %v179 = vunpack.c.l.b16 %v128
    %v180 = vunpack.c.h.b16 %v128
    %v181 = vunpack.c.l.b16 %v129
    %v182 = vunpack.c.h.b16 %v129
    %v183 = vunpack.c.l.b16 %v130
    %v184 = vunpack.c.h.b16 %v130
    %v185 = vpack.c.b16 %v155, %v153
    %v186 = vpack.c.b16 %v156, %v154
    %v187 = vpack.c.b16 %v159, %v157
    %v188 = vpack.c.b16 %v160, %v158
    %v189 = vpack.c.b16 %v163, %v161
    %v190 = vpack.c.b16 %v164, %v162
    %v191 = vpack.c.b16 %v167, %v165
    %v192 = vpack.c.b16 %v168, %v166
    %v193 = vpack.c.b16 %v171, %v169
    %v194 = vpack.c.b16 %v172, %v170
    %v195 = vpack.c.b16 %v175, %v173
    %v196 = vpack.c.b16 %v176, %v174
    %v197 = vpack.c.b16 %v179, %v177
    %v198 = vpack.c.b16 %v180, %v178
    %v199 = vpack.c.b16 %v183, %v181
    %v200 = vpack.c.b16 %v184, %v182
    %217 = vmatpush.bf16.msra.mxu0 %v199
    %218 = vmatpush.bf16.msra.mxu0 %v197
    %219 = vmatpush.bf16.msra.mxu0 %v195
    %220 = vmatpush.bf16.msra.mxu0 %v193
    %221 = vmatpush.bf16.msra.mxu0 %v191
    %222 = vmatpush.bf16.msra.mxu0 %v189
    %223 = vmatpush.bf16.msra.mxu0 %v187
    %224 = vmatpush.bf16.msra.mxu0 %v185
    %225 = vmatmul.bf16.gmra.mxu0 %v135
    %v226 = vpop.f32.mrf.mxu0
    %v227 = vadd.f32 0.0, %v226
    %v228 = vpop.f32.mrf.mxu0
    %v229 = vadd.f32 0.0, %v228
    %230 = vdwg.mxu0
    %231 = vmatpush.bf16.msra.mxu0 %v200
    %232 = vmatpush.bf16.msra.mxu0 %v198
    %233 = vmatpush.bf16.msra.mxu0 %v196
    %234 = vmatpush.bf16.msra.mxu0 %v194
    %235 = vmatpush.bf16.msra.mxu0 %v192
    %236 = vmatpush.bf16.msra.mxu0 %v190
    %237 = vmatpush.bf16.msra.mxu0 %v188
    %238 = vmatpush.bf16.msra.mxu0 %v186
    %239 = vmatmul.bf16.gmra.mxu0 %v135
    %v240 = vpop.f32.mrf.mxu0
    %v241 = vadd.f32 0.0, %v240
    %v242 = vpop.f32.mrf.mxu0
    %v243 = vadd.f32 0.0, %v242
    %244 = vdwg.mxu0
    %v245 = vld [vmem:[#allocation7] sm:$0xff]
    %v246 = vld [vmem:[#allocation7 + $0x8] sm:$0xff]
    %v247 = vld [vmem:[#allocation7 + $0x10] sm:$0xff]
    %v248 = vld [vmem:[#allocation7 + $0x18] sm:$0xff]
    %v249 = vld [vmem:[#allocation7 + $0x20] sm:$0xff]
    %v250 = vld [vmem:[#allocation7 + $0x28] sm:$0xff]
    %v251 = vld [vmem:[#allocation7 + $0x30] sm:$0xff]
    %v252 = vld [vmem:[#allocation7 + $0x38] sm:$0xff]
    %v253 = vld [vmem:[#allocation7 + $0x40] sm:$0xff]
    %v254 = vld [vmem:[#allocation7 + $0x48] sm:$0xff]
    %v255 = vld [vmem:[#allocation7 + $0x50] sm:$0xff]
    %v256 = vld [vmem:[#allocation7 + $0x58] sm:$0xff]
    %v257 = vld [vmem:[#allocation7 + $0x60] sm:$0xff]
    %v258 = vld [vmem:[#allocation7 + $0x68] sm:$0xff]
    %v259 = vld [vmem:[#allocation7 + $0x70] sm:$0xff]
    %v260 = vld [vmem:[#allocation7 + $0x78] sm:$0xff]
    %v261 = vunpack.c.h.b16 %v111
    %v262 = vunpack.c.h.b16 %v113
    %v263 = vpack.c.b16 %v262, %v261
    %v281 = vunpack.c.l.b16 %v245
    %v282 = vunpack.c.h.b16 %v245
    %v283 = vunpack.c.l.b16 %v246
    %v284 = vunpack.c.h.b16 %v246
    %v285 = vunpack.c.l.b16 %v247
    %v286 = vunpack.c.h.b16 %v247
    %v287 = vunpack.c.l.b16 %v248
    %v288 = vunpack.c.h.b16 %v248
    %v289 = vunpack.c.l.b16 %v249
    %v290 = vunpack.c.h.b16 %v249
    %v291 = vunpack.c.l.b16 %v250
    %v292 = vunpack.c.h.b16 %v250
    %v293 = vunpack.c.l.b16 %v251
    %v294 = vunpack.c.h.b16 %v251
    %v295 = vunpack.c.l.b16 %v252
    %v296 = vunpack.c.h.b16 %v252
    %v297 = vunpack.c.l.b16 %v253
    %v298 = vunpack.c.h.b16 %v253
    %v299 = vunpack.c.l.b16 %v254
    %v300 = vunpack.c.h.b16 %v254
    %v301 = vunpack.c.l.b16 %v255
    %v302 = vunpack.c.h.b16 %v255
    %v303 = vunpack.c.l.b16 %v256
    %v304 = vunpack.c.h.b16 %v256
    %v305 = vunpack.c.l.b16 %v257
    %v306 = vunpack.c.h.b16 %v257
    %v307 = vunpack.c.l.b16 %v258
    %v308 = vunpack.c.h.b16 %v258
    %v309 = vunpack.c.l.b16 %v259
    %v310 = vunpack.c.h.b16 %v259
    %v311 = vunpack.c.l.b16 %v260
    %v312 = vunpack.c.h.b16 %v260
    %v313 = vpack.c.b16 %v283, %v281
    %v314 = vpack.c.b16 %v284, %v282
    %v315 = vpack.c.b16 %v287, %v285
    %v316 = vpack.c.b16 %v288, %v286
    %v317 = vpack.c.b16 %v291, %v289
    %v318 = vpack.c.b16 %v292, %v290
    %v319 = vpack.c.b16 %v295, %v293
    %v320 = vpack.c.b16 %v296, %v294
    %v321 = vpack.c.b16 %v299, %v297
    %v322 = vpack.c.b16 %v300, %v298
    %v323 = vpack.c.b16 %v303, %v301
    %v324 = vpack.c.b16 %v304, %v302
    %v325 = vpack.c.b16 %v307, %v305
    %v326 = vpack.c.b16 %v308, %v306
    %v327 = vpack.c.b16 %v311, %v309
    %v328 = vpack.c.b16 %v312, %v310
    %345 = vmatpush.bf16.msra.mxu0 %v327
    %346 = vmatpush.bf16.msra.mxu0 %v325
    %347 = vmatpush.bf16.msra.mxu0 %v323
    %348 = vmatpush.bf16.msra.mxu0 %v321
    %349 = vmatpush.bf16.msra.mxu0 %v319
    %350 = vmatpush.bf16.msra.mxu0 %v317
    %351 = vmatpush.bf16.msra.mxu0 %v315
    %352 = vmatpush.bf16.msra.mxu0 %v313
    %353 = vmatmul.bf16.gmra.mxu0 %v263
    %v354 = vpop.f32.mrf.mxu0
    %v355 = vadd.f32 0.0, %v354
    %v356 = vpop.f32.mrf.mxu0
    %v357 = vadd.f32 0.0, %v356
    %358 = vdwg.mxu0
    %359 = vmatpush.bf16.msra.mxu0 %v328
    %360 = vmatpush.bf16.msra.mxu0 %v326
    %361 = vmatpush.bf16.msra.mxu0 %v324
    %362 = vmatpush.bf16.msra.mxu0 %v322
    %363 = vmatpush.bf16.msra.mxu0 %v320
    %364 = vmatpush.bf16.msra.mxu0 %v318
    %365 = vmatpush.bf16.msra.mxu0 %v316
    %366 = vmatpush.bf16.msra.mxu0 %v314
    %367 = vmatmul.bf16.gmra.mxu0 %v263
    %v368 = vpop.f32.mrf.mxu0
    %v369 = vadd.f32 0.0, %v368
    %v370 = vpop.f32.mrf.mxu0
    %v371 = vadd.f32 0.0, %v370
    %372 = vdwg.mxu0
    %v373 = vld [vmem:[#allocation8] sm:$0xf]
    %v374 = vld [vmem:[#allocation8 + $0x4] sm:$0xf]
    %v375 = vld [vmem:[#allocation8 + $0x8] sm:$0xf]
    %v376 = vld [vmem:[#allocation8 + $0xc] sm:$0xf]
    %v377 = vld [vmem:[#allocation8 + $0x10] sm:$0xf]
    %v378 = vld [vmem:[#allocation8 + $0x14] sm:$0xf]
    %v379 = vld [vmem:[#allocation8 + $0x18] sm:$0xf]
    %v380 = vld [vmem:[#allocation8 + $0x1c] sm:$0xf]
    %v381 = vld [vmem:[#allocation8 + $0x20] sm:$0xf]
    %v382 = vld [vmem:[#allocation8 + $0x24] sm:$0xf]
    %v383 = vld [vmem:[#allocation8 + $0x28] sm:$0xf]
    %v384 = vld [vmem:[#allocation8 + $0x2c] sm:$0xf]
    %v385 = vld [vmem:[#allocation8 + $0x30] sm:$0xf]
    %v386 = vld [vmem:[#allocation8 + $0x34] sm:$0xf]
    %v387 = vld [vmem:[#allocation8 + $0x38] sm:$0xf]
    %v388 = vld [vmem:[#allocation8 + $0x3c] sm:$0xf]
    %v391 = vunpack.c.l.b16 %v112
    %v392 = vunpack.c.l.b16 %v114
    %v393 = vpack.c.b16 %v392, %v391
    %v411 = vunpack.c.l.b16 %v373
    %v412 = vunpack.c.l.b16 %v374
    %v413 = vunpack.c.l.b16 %v375
    %v414 = vunpack.c.l.b16 %v376
    %v415 = vunpack.c.l.b16 %v377
    %v416 = vunpack.c.l.b16 %v378
    %v417 = vunpack.c.l.b16 %v379
    %v418 = vunpack.c.l.b16 %v380
    %v419 = vunpack.c.l.b16 %v381
    %v420 = vunpack.c.l.b16 %v382
    %v421 = vunpack.c.l.b16 %v383
    %v422 = vunpack.c.l.b16 %v384
    %v423 = vunpack.c.l.b16 %v385
    %v424 = vunpack.c.l.b16 %v386
    %v425 = vunpack.c.l.b16 %v387
    %v426 = vunpack.c.l.b16 %v388
    %v427 = vpack.c.b16 %v412, %v411
    %v428 = vpack.c.b16 %v414, %v413
    %v429 = vpack.c.b16 %v416, %v415
    %v430 = vpack.c.b16 %v418, %v417
    %v431 = vpack.c.b16 %v420, %v419
    %v432 = vpack.c.b16 %v422, %v421
    %v433 = vpack.c.b16 %v424, %v423
    %v434 = vpack.c.b16 %v426, %v425
    %443 = vmatpush.bf16.msra.mxu0 %v434
    %444 = vmatpush.bf16.msra.mxu0 %v433
    %445 = vmatpush.bf16.msra.mxu0 %v432
    %446 = vmatpush.bf16.msra.mxu0 %v431
    %447 = vmatpush.bf16.msra.mxu0 %v430
    %448 = vmatpush.bf16.msra.mxu0 %v429
    %449 = vmatpush.bf16.msra.mxu0 %v428
    %450 = vmatpush.bf16.msra.mxu0 %v427
    %451 = vmatmul.bf16.gmra.mxu0 %v393
    %v452 = vpop.f32.mrf.mxu0
    %v453 = vadd.f32 0.0, %v452
    %v454 = vpop.f32.mrf.mxu0
    %v455 = vadd.f32 0.0, %v454
    %456 = vdwg.mxu0
    %v457 = vadd.f32 %v227, %v355
    %v458 = vadd.f32 %v229, %v357
    %v459 = vadd.f32 %v457, %v453
    %v460 = vadd.f32 %v458, %v455
    %v461 = vld [vmem:[%s5] sm:$0x1]
    %v463 = vperm.slane %v461, 0
    %v465 = vadd.f32 %v459, %v463
    %v466 = vadd.f32 %v460, %v463
    %v467 = vpack.c.bf16 %v466, %v465
    %v468 = vld [vmem:[#allocation10] sm:$0xff]
    %v469 = vld [vmem:[#allocation10 + $0x8] sm:$0xff]
    %v470 = vld [vmem:[#allocation10 + $0x10] sm:$0xff]
    %v471 = vld [vmem:[#allocation10 + $0x18] sm:$0xff]
    %v472 = vld [vmem:[#allocation10 + $0x20] sm:$0xff]
    %v473 = vld [vmem:[#allocation10 + $0x28] sm:$0xff]
    %v474 = vld [vmem:[#allocation10 + $0x30] sm:$0xff]
    %v475 = vld [vmem:[#allocation10 + $0x38] sm:$0xff]
    %v476 = vld [vmem:[#allocation10 + $0x40] sm:$0xff]
    %v477 = vld [vmem:[#allocation10 + $0x48] sm:$0xff]
    %v478 = vld [vmem:[#allocation10 + $0x50] sm:$0xff]
    %v479 = vld [vmem:[#allocation10 + $0x58] sm:$0xff]
    %v480 = vld [vmem:[#allocation10 + $0x60] sm:$0xff]
    %v481 = vld [vmem:[#allocation10 + $0x68] sm:$0xff]
    %v482 = vld [vmem:[#allocation10 + $0x70] sm:$0xff]
    %v483 = vld [vmem:[#allocation10 + $0x78] sm:$0xff]
    %v500 = vunpack.c.l.b16 %v468
    %v501 = vunpack.c.h.b16 %v468
    %v502 = vunpack.c.l.b16 %v469
    %v503 = vunpack.c.h.b16 %v469
    %v504 = vunpack.c.l.b16 %v470
    %v505 = vunpack.c.h.b16 %v470
    %v506 = vunpack.c.l.b16 %v471
    %v507 = vunpack.c.h.b16 %v471
    %v508 = vunpack.c.l.b16 %v472
    %v509 = vunpack.c.h.b16 %v472
    %v510 = vunpack.c.l.b16 %v473
    %v511 = vunpack.c.h.b16 %v473
    %v512 = vunpack.c.l.b16 %v474
    %v513 = vunpack.c.h.b16 %v474
    %v514 = vunpack.c.l.b16 %v475
    %v515 = vunpack.c.h.b16 %v475
    %v516 = vunpack.c.l.b16 %v476
    %v517 = vunpack.c.h.b16 %v476
    %v518 = vunpack.c.l.b16 %v477
    %v519 = vunpack.c.h.b16 %v477
    %v520 = vunpack.c.l.b16 %v478
    %v521 = vunpack.c.h.b16 %v478
    %v522 = vunpack.c.l.b16 %v479
    %v523 = vunpack.c.h.b16 %v479
    %v524 = vunpack.c.l.b16 %v480
    %v525 = vunpack.c.h.b16 %v480
    %v526 = vunpack.c.l.b16 %v481
    %v527 = vunpack.c.h.b16 %v481
    %v528 = vunpack.c.l.b16 %v482
    %v529 = vunpack.c.h.b16 %v482
    %v530 = vunpack.c.l.b16 %v483
    %v531 = vunpack.c.h.b16 %v483
    %v532 = vpack.c.b16 %v502, %v500
    %v533 = vpack.c.b16 %v503, %v501
    %v534 = vpack.c.b16 %v506, %v504
    %v535 = vpack.c.b16 %v507, %v505
    %v536 = vpack.c.b16 %v510, %v508
    %v537 = vpack.c.b16 %v511, %v509
    %v538 = vpack.c.b16 %v514, %v512
    %v539 = vpack.c.b16 %v515, %v513
    %v540 = vpack.c.b16 %v518, %v516
    %v541 = vpack.c.b16 %v519, %v517
    %v542 = vpack.c.b16 %v522, %v520
    %v543 = vpack.c.b16 %v523, %v521
    %v544 = vpack.c.b16 %v526, %v524
    %v545 = vpack.c.b16 %v527, %v525
    %v546 = vpack.c.b16 %v530, %v528
    %v547 = vpack.c.b16 %v531, %v529
    %564 = vmatpush.bf16.msra.mxu0 %v546
    %565 = vmatpush.bf16.msra.mxu0 %v544
    %566 = vmatpush.bf16.msra.mxu0 %v542
    %567 = vmatpush.bf16.msra.mxu0 %v540
    %568 = vmatpush.bf16.msra.mxu0 %v538
    %569 = vmatpush.bf16.msra.mxu0 %v536
    %570 = vmatpush.bf16.msra.mxu0 %v534
    %571 = vmatpush.bf16.msra.mxu0 %v532
    %572 = vmatmul.bf16.gmra.mxu0 %v467
    %v573 = vpop.f32.mrf.mxu0
    %v574 = vadd.f32 0.0, %v573
    %v575 = vpop.f32.mrf.mxu0
    %v576 = vadd.f32 0.0, %v575
    %577 = vdwg.mxu0
    %578 = vmatpush.bf16.msra.mxu0 %v547
    %579 = vmatpush.bf16.msra.mxu0 %v545
    %580 = vmatpush.bf16.msra.mxu0 %v543
    %581 = vmatpush.bf16.msra.mxu0 %v541
    %582 = vmatpush.bf16.msra.mxu0 %v539
    %583 = vmatpush.bf16.msra.mxu0 %v537
    %584 = vmatpush.bf16.msra.mxu0 %v535
    %585 = vmatpush.bf16.msra.mxu0 %v533
    %586 = vmatmul.bf16.gmra.mxu0 %v467
    %v587 = vpop.f32.mrf.mxu0
    %v588 = vadd.f32 0.0, %v587
    %v589 = vpop.f32.mrf.mxu0
    %v590 = vadd.f32 0.0, %v589
    %591 = vdwg.mxu0
    %v592 = vadd.f32 %v241, %v574
    %v593 = vadd.f32 %v243, %v576
    %v594 = vld [vmem:[%s6] sm:$0x1]
    %v596 = vperm.slane %v594, 0
    %v598 = vadd.f32 %v592, %v596
    %v599 = vadd.f32 %v593, %v596
    %v600 = vadd.f32 %v369, %v588
    %v601 = vadd.f32 %v371, %v590
    %v602 = vld [vmem:[%s7] sm:$0x1]
    %v604 = vperm.slane %v602, 0
    %v606 = vadd.f32 %v600, %v604
    %v607 = vadd.f32 %v601, %v604
    %608 = vst [vmem:[#allocation11] sm:$0xff] %v465
    %609 = vst [vmem:[#allocation11 + $0x8] sm:$0xff] %v466
    %v610 = vmul.f32 %v598, %v606
    %v611 = vmul.f32 %v599, %v607
    %612 = vadd.xlane.f32.xlu0 %v610
    %v613 = vpop.xlane.xlu0 %612
    %614 = vadd.xlane.f32.xlu0 %v611
    %v615 = vpop.xlane.xlu0 %614
    %v616 = vmul.f32 %v613, 0.17677669
    %v617 = vmul.f32 %v615, 0.17677669
    %618 = vst [vmem:[#allocation12] sm:$0xff] %v616
    %619 = vst [vmem:[#allocation12 + $0x8] sm:$0xff] %v617
    // Predicated region
    $region54: #{tpu_custom_call.1} parent=1 // pred_check
      _
    $region55: #{tpu_custom_call.1} parent=1 // pred_check_branch
      %621 = sbr.rel (0) target = $region57
    $region56: #{tpu_custom_call.1} parent=1 // pred_region
      %623 = vsyncadd [#allocation4], 0
      %s624 = sshll.u32 [#allocation11], 4
      %s625 = int_to_ptr.vmem [resolvable:$true] %s624
      %s626 = sshll.u32 %s8, 4
      %s627 = int_to_ptr.hbm [resolvable:$true] %s626
      %632 = dma.vmem_to_hbm [thread:$0]  %s625, 256, %s627, [#allocation4], 128, 128, 8
    $region57: #{tpu_custom_call.1} parent=1 // pred_fallthru
      _
    // Predicated region
    $region58: #{tpu_custom_call.1} parent=1 // pred_check
      _
    $region59: #{tpu_custom_call.1} parent=1 // pred_check_branch
      %634 = sbr.rel (0) target = $region61
    $region60: #{tpu_custom_call.1} parent=1 // pred_region
      %636 = vsyncadd [#allocation13], 0
      %s637 = sshll.u32 [#allocation12], 4
      %s638 = int_to_ptr.vmem [resolvable:$true] %s637
      %s639 = sshll.u32 %s9, 4
      %s640 = int_to_ptr.hbm [resolvable:$true] %s639
      %645 = dma.vmem_to_hbm [thread:$0]  %s638, 256, %s640, [#allocation13], 128, 128, 8
    $region61: #{tpu_custom_call.1} parent=1 // pred_fallthru
      _
    // Predicated region
    $region62: #{tpu_custom_call.1} parent=1 // pred_check
      _
    $region63: #{tpu_custom_call.1} parent=1 // pred_check_branch
      %647 = sbr.rel (0) target = $region65
    $region64: #{tpu_custom_call.1} parent=1 // pred_region
      %649 = dma.done [#allocation4], 256
    $region65: #{tpu_custom_call.1} parent=1 // pred_fallthru
      _
    // Predicated region
    $region66: #{tpu_custom_call.1} parent=1 // pred_check
      _
    $region67: #{tpu_custom_call.1} parent=1 // pred_check_branch
      %651 = sbr.rel (0) target = $region69
    $region68: #{tpu_custom_call.1} parent=1 // pred_region
      %653 = dma.done [#allocation13], 256
    $region69: #{tpu_custom_call.1} parent=1 // pred_fallthru
      _
    %654 = vsyncpa [#allocation3], 1
    %655 = vsyncpa [#allocation6], 1
    %656 = vsyncpa [#allocation9], 1
    %657 = vsyncpa [#allocation4], 1
    %658 = vsyncpa [#allocation13], 1

// kernel: tpu_custom_call.1
$region0: #{tpu_custom_call.1}
  #allocation0 [shape = 'u32[]', space=smem, size = 0x4, offset = 0x4, fixed_abs, tag = 'smem constant byte address 0x4 - core index']
  #allocation1 [shape = 'u32[72,128]{1,0:T(1,128)}', space=vmem, size = 0x9000, scoped, tag = 'internal scratch']
  %s0 = inlined_call_operand.hbm [shape: bf16[16,384], index: 0, kind: input, shape index: {}]
  %s1 = inlined_call_operand.hbm [shape: bf16[128,256], index: 1, kind: input, shape index: {}]
  %s2 = inlined_call_operand.hbm [shape: bf16[128,256], index: 2, kind: input, shape index: {}]
  %s3 = inlined_call_operand.hbm [shape: bf16[128,128], index: 3, kind: input, shape index: {}]
  %s4 = inlined_call_operand.hbm [shape: bf16[128,256], index: 4, kind: input, shape index: {}]
  %s5 = inlined_call_operand.vmem [shape: f32[1,128], index: 5, kind: input, shape index: {}]
  %s6 = inlined_call_operand.vmem [shape: f32[1,128], index: 6, kind: input, shape index: {}]
  %s7 = inlined_call_operand.vmem [shape: f32[1,128], index: 7, kind: input, shape index: {}]
  %s8 = inlined_call_operand.hbm [shape: f32[16,128], index: 8, kind: output, shape index: {0}]
  %s9 = inlined_call_operand.hbm [shape: f32[16,128], index: 9, kind: output, shape index: {1}]
  %10 = xla_tuple %s8, %s9
  %s11 = sld [smem:[#allocation0]]
  $region70: #{tpu_custom_call.1} parent=0
    _
  %s13 = ssub.s32 1, %s11
  %s14 = scalar_select 0, %s13, %s11
  $region1: #{tpu_custom_call.1} parent=0
    #allocation2 [shape = 'u8[12288]{0}', space=vmem, size = 0x3000, scoped, tag = 'input window, operand 0, single buffered']
    #allocation3 [shape = 's32[1]{0}', space=sflag, size = 0x4, scoped, tag = 'scoped memory for tpu_custom_call.1']
    #allocation4 [shape = 's32[1]{0}', space=sflag, size = 0x4, scoped, tag = 'scoped memory for tpu_custom_call.1']
    #allocation5 [shape = 'u8[65536]{0}', space=vmem, size = 0x10000, scoped, tag = 'input window, operand 1, single buffered']
    #allocation6 [shape = 's32[1]{0}', space=sflag, size = 0x4, scoped, tag = 'scoped memory for tpu_custom_call.1']
    #allocation7 [shape = 'u8[65536]{0}', space=vmem, size = 0x10000, scoped, tag = 'input window, operand 2, single buffered']
    #allocation8 [shape = 'u8[32768]{0}', space=vmem, size = 0x8000, scoped, tag = 'input window, operand 3, single buffered']
    #allocation9 [shape = 's32[1]{0}', space=sflag, size = 0x4, scoped, tag = 'scoped memory for tpu_custom_call.1']
    #allocation10 [shape = 'u8[65536]{0}', space=vmem, size = 0x10000, scoped, tag = 'input window, operand 4, single buffered']
    #allocation11 [shape = 'u8[8192]{0}', space=vmem, size = 0x2000, scoped, tag = 'output window, operand 0, single buffered']
    #allocation12 [shape = 'u8[8192]{0}', space=vmem, size = 0x2000, scoped, tag = 'output window, operand 1, single buffered']
    #allocation13 [shape = 's32[1]{0}', space=sflag, size = 0x4, scoped, tag = 'scoped memory for tpu_custom_call.1']
    %15 = vsyncpa [#allocation3], 0
    %16 = vsyncpa [#allocation6], 0
    %17 = vsyncpa [#allocation9], 0
    %18 = vsyncpa [#allocation4], 0
    %19 = vsyncpa [#allocation13], 0
    // Predicated region
    $region2: #{tpu_custom_call.1} parent=1 // pred_check
      _
    $region3: #{tpu_custom_call.1} parent=1 // pred_check_branch
      %21 = sbr.rel (0) target = $region5
    $region4: #{tpu_custom_call.1} parent=1 // pred_region
      %23 = vsyncadd [#allocation3], 0
      %s24 = sshll.u32 %s0, 4
      %s25 = int_to_ptr.hbm [resolvable:$true] %s24
      %s26 = sshll.u32 [#allocation2], 4
      %s27 = int_to_ptr.vmem [resolvable:$true] %s26
      %32 = dma.hbm_to_vmem [thread:$0]  %s25, 384, %s27, [#allocation3], 192, 192, 12
    $region5: #{tpu_custom_call.1} parent=1 // pred_fallthru
      _
    // Predicated region
    $region6: #{tpu_custom_call.1} parent=1 // pred_check
      _
    $region7: #{tpu_custom_call.1} parent=1 // pred_check_branch
      %34 = sbr.rel (0) target = $region9
    $region8: #{tpu_custom_call.1} parent=1 // pred_region
      %36 = vsyncadd [#allocation6], 0
      %s37 = sshll.u32 %s1, 4
      %s38 = int_to_ptr.hbm [resolvable:$true] %s37
      %s39 = sshll.u32 [#allocation5], 4
      %s40 = int_to_ptr.vmem [resolvable:$true] %s39
      %45 = dma.hbm_to_vmem [thread:$0]  %s38, 2048, %s40, [#allocation6], 128, 128, 8
    $region9: #{tpu_custom_call.1} parent=1 // pred_fallthru
      _
    // Predicated region
    $region10: #{tpu_custom_call.1} parent=1 // pred_check
      _
    $region11: #{tpu_custom_call.1} parent=1 // pred_check_branch
      %47 = sbr.rel (0) target = $region13
    $region12: #{tpu_custom_call.1} parent=1 // pred_region
      %49 = vsyncadd [#allocation6], 0
      %s50 = sshll.u32 %s2, 4
      %s51 = int_to_ptr.hbm [resolvable:$true] %s50
      %s52 = sshll.u32 [#allocation7], 4
      %s53 = int_to_ptr.vmem [resolvable:$true] %s52
      %58 = dma.hbm_to_vmem [thread:$0]  %s51, 2048, %s53, [#allocation6], 128, 128, 8
    $region13: #{tpu_custom_call.1} parent=1 // pred_fallthru
      _
    // Predicated region
    $region14: #{tpu_custom_call.1} parent=1 // pred_check
      _
    $region15: #{tpu_custom_call.1} parent=1 // pred_check_branch
      %60 = sbr.rel (0) target = $region17
    $region16: #{tpu_custom_call.1} parent=1 // pred_region
      %62 = vsyncadd [#allocation9], 0
      %s63 = sshll.u32 %s3, 4
      %s64 = int_to_ptr.hbm [resolvable:$true] %s63
      %s65 = sshll.u32 [#allocation8], 4
      %s66 = int_to_ptr.vmem [resolvable:$true] %s65
      %71 = dma.hbm_to_vmem [thread:$0]  %s64, 1024, %s66, [#allocation9], 64, 64, 4
    $region17: #{tpu_custom_call.1} parent=1 // pred_fallthru
      _
    // Predicated region
    $region18: #{tpu_custom_call.1} parent=1 // pred_check
      _
    $region19: #{tpu_custom_call.1} parent=1 // pred_check_branch
      %73 = sbr.rel (0) target = $region21
    $region20: #{tpu_custom_call.1} parent=1 // pred_region
      %75 = vsyncadd [#allocation9], 0
      %s76 = sshll.u32 %s4, 4
      %s77 = int_to_ptr.hbm [resolvable:$true] %s76
      %s78 = sshll.u32 [#allocation10], 4
      %s79 = int_to_ptr.vmem [resolvable:$true] %s78
      %84 = dma.hbm_to_vmem [thread:$0]  %s77, 2048, %s79, [#allocation9], 128, 128, 8
    $region21: #{tpu_custom_call.1} parent=1 // pred_fallthru
      _
    // Predicated region
    $region22: #{tpu_custom_call.1} parent=1 // pred_check
      _
    $region23: #{tpu_custom_call.1} parent=1 // pred_check_branch
      %86 = sbr.rel (0) target = $region25
    $region24: #{tpu_custom_call.1} parent=1 // pred_region
      _
    $region25: #{tpu_custom_call.1} parent=1 // pred_fallthru
      _
    // Predicated region
    $region26: #{tpu_custom_call.1} parent=1 // pred_check
      _
    $region27: #{tpu_custom_call.1} parent=1 // pred_check_branch
      %88 = sbr.rel (0) target = $region29
    $region28: #{tpu_custom_call.1} parent=1 // pred_region
      _
    $region29: #{tpu_custom_call.1} parent=1 // pred_fallthru
      _
    // Predicated region
    $region30: #{tpu_custom_call.1} parent=1 // pred_check
      _
    $region31: #{tpu_custom_call.1} parent=1 // pred_check_branch
      %90 = sbr.rel (0) target = $region33
    $region32: #{tpu_custom_call.1} parent=1 // pred_region
      _
    $region33: #{tpu_custom_call.1} parent=1 // pred_fallthru
      _
    // Predicated region
    $region34: #{tpu_custom_call.1} parent=1 // pred_check
      _
    $region35: #{tpu_custom_call.1} parent=1 // pred_check_branch
      %92 = sbr.rel (0) target = $region37
    $region36: #{tpu_custom_call.1} parent=1 // pred_region
      %94 = dma.done [#allocation3], 384
    $region37: #{tpu_custom_call.1} parent=1 // pred_fallthru
      _
    // Predicated region
    $region38: #{tpu_custom_call.1} parent=1 // pred_check
      _
    $region39: #{tpu_custom_call.1} parent=1 // pred_check_branch
      %96 = sbr.rel (0) target = $region41
    $region40: #{tpu_custom_call.1} parent=1 // pred_region
      %98 = dma.done [#allocation6], 2048
    $region41: #{tpu_custom_call.1} parent=1 // pred_fallthru
      _
    // Predicated region
    $region42: #{tpu_custom_call.1} parent=1 // pred_check
      _
    $region43: #{tpu_custom_call.1} parent=1 // pred_check_branch
      %100 = sbr.rel (0) target = $region45
    $region44: #{tpu_custom_call.1} parent=1 // pred_region
      %102 = dma.done [#allocation6], 2048
    $region45: #{tpu_custom_call.1} parent=1 // pred_fallthru
      _
    // Predicated region
    $region46: #{tpu_custom_call.1} parent=1 // pred_check
      _
    $region47: #{tpu_custom_call.1} parent=1 // pred_check_branch
      %104 = sbr.rel (0) target = $region49
    $region48: #{tpu_custom_call.1} parent=1 // pred_region
      %106 = dma.done [#allocation9], 1024
    $region49: #{tpu_custom_call.1} parent=1 // pred_fallthru
      _
    // Predicated region
    $region50: #{tpu_custom_call.1} parent=1 // pred_check
      _
    $region51: #{tpu_custom_call.1} parent=1 // pred_check_branch
      %108 = sbr.rel (0) target = $region53
    $region52: #{tpu_custom_call.1} parent=1 // pred_region
      %110 = dma.done [#allocation9], 2048
    $region53: #{tpu_custom_call.1} parent=1 // pred_fallthru
      _
    %v111 = vld [vmem:[#allocation2] sm:$0xff]
    %v112 = vld [vmem:[#allocation2 + $0x8] sm:$0xf]
    %v113 = vld [vmem:[#allocation2 + $0xc] sm:$0xff]
    %v114 = vld [vmem:[#allocation2 + $0x14] sm:$0xf]
    %v115 = vld [vmem:[#allocation5] sm:$0xff]
    %v116 = vld [vmem:[#allocation5 + $0x8] sm:$0xff]
    %v117 = vld [vmem:[#allocation5 + $0x10] sm:$0xff]
    %v118 = vld [vmem:[#allocation5 + $0x18] sm:$0xff]
    %v119 = vld [vmem:[#allocation5 + $0x20] sm:$0xff]
    %v120 = vld [vmem:[#allocation5 + $0x28] sm:$0xff]
    %v121 = vld [vmem:[#allocation5 + $0x30] sm:$0xff]
    %v122 = vld [vmem:[#allocation5 + $0x38] sm:$0xff]
    %v123 = vld [vmem:[#allocation5 + $0x40] sm:$0xff]
    %v124 = vld [vmem:[#allocation5 + $0x48] sm:$0xff]
    %v125 = vld [vmem:[#allocation5 + $0x50] sm:$0xff]
    %v126 = vld [vmem:[#allocation5 + $0x58] sm:$0xff]
    %v127 = vld [vmem:[#allocation5 + $0x60] sm:$0xff]
    %v128 = vld [vmem:[#allocation5 + $0x68] sm:$0xff]
    %v129 = vld [vmem:[#allocation5 + $0x70] sm:$0xff]
    %v130 = vld [vmem:[#allocation5 + $0x78] sm:$0xff]
    %v133 = vunpack.c.l.b16 %v111
    %v134 = vunpack.c.l.b16 %v113
    %v135 = vpack.c.b16 %v134, %v133
    %v153 = vunpack.c.l.b16 %v115
    %v154 = vunpack.c.h.b16 %v115
    %v155 = vunpack.c.l.b16 %v116
    %v156 = vunpack.c.h.b16 %v116
    %v157 = vunpack.c.l.b16 %v117
    %v158 = vunpack.c.h.b16 %v117
    %v159 = vunpack.c.l.b16 %v118
    %v160 = vunpack.c.h.b16 %v118
    %v161 = vunpack.c.l.b16 %v119
    %v162 = vunpack.c.h.b16 %v119
    %v163 = vunpack.c.l.b16 %v120
    %v164 = vunpack.c.h.b16 %v120
    %v165 = vunpack.c.l.b16 %v121
    %v166 = vunpack.c.h.b16 %v121
    %v167 = vunpack.c.l.b16 %v122
    %v168 = vunpack.c.h.b16 %v122
    %v169 = vunpack.c.l.b16 %v123
    %v170 = vunpack.c.h.b16 %v123
    %v171 = vunpack.c.l.b16 %v124
    %v172 = vunpack.c.h.b16 %v124
    %v173 = vunpack.c.l.b16 %v125
    %v174 = vunpack.c.h.b16 %v125
    %v175 = vunpack.c.l.b16 %v126
    %v176 = vunpack.c.h.b16 %v126
    %v177 = vunpack.c.l.b16 %v127
    %v178 = vunpack.c.h.b16 %v127
    %v179 = vunpack.c.l.b16 %v128
    %v180 = vunpack.c.h.b16 %v128
    %v181 = vunpack.c.l.b16 %v129
    %v182 = vunpack.c.h.b16 %v129
    %v183 = vunpack.c.l.b16 %v130
    %v184 = vunpack.c.h.b16 %v130
    %v185 = vpack.c.b16 %v155, %v153
    %v186 = vpack.c.b16 %v156, %v154
    %v187 = vpack.c.b16 %v159, %v157
    %v188 = vpack.c.b16 %v160, %v158
    %v189 = vpack.c.b16 %v163, %v161
    %v190 = vpack.c.b16 %v164, %v162
    %v191 = vpack.c.b16 %v167, %v165
    %v192 = vpack.c.b16 %v168, %v166
    %v193 = vpack.c.b16 %v171, %v169
    %v194 = vpack.c.b16 %v172, %v170
    %v195 = vpack.c.b16 %v175, %v173
    %v196 = vpack.c.b16 %v176, %v174
    %v197 = vpack.c.b16 %v179, %v177
    %v198 = vpack.c.b16 %v180, %v178
    %v199 = vpack.c.b16 %v183, %v181
    %v200 = vpack.c.b16 %v184, %v182
    %217 = vmatpush.bf16.msra.mxu0 %v199
    %218 = vmatpush.bf16.msra.mxu0 %v197
    %219 = vmatpush.bf16.msra.mxu0 %v195
    %220 = vmatpush.bf16.msra.mxu0 %v193
    %221 = vmatpush.bf16.msra.mxu0 %v191
    %222 = vmatpush.bf16.msra.mxu0 %v189
    %223 = vmatpush.bf16.msra.mxu0 %v187
    %224 = vmatpush.bf16.msra.mxu0 %v185
    %225 = vmatmul.bf16.gmra.mxu0 %v135
    %v226 = vpop.f32.mrf.mxu0
    %v227 = vadd.f32 0.0, %v226
    %v228 = vpop.f32.mrf.mxu0
    %v229 = vadd.f32 0.0, %v228
    %230 = vdwg.mxu0
    %231 = vmatpush.bf16.msra.mxu0 %v200
    %232 = vmatpush.bf16.msra.mxu0 %v198
    %233 = vmatpush.bf16.msra.mxu0 %v196
    %234 = vmatpush.bf16.msra.mxu0 %v194
    %235 = vmatpush.bf16.msra.mxu0 %v192
    %236 = vmatpush.bf16.msra.mxu0 %v190
    %237 = vmatpush.bf16.msra.mxu0 %v188
    %238 = vmatpush.bf16.msra.mxu0 %v186
    %239 = vmatmul.bf16.gmra.mxu0 %v135
    %v240 = vpop.f32.mrf.mxu0
    %v241 = vadd.f32 0.0, %v240
    %v242 = vpop.f32.mrf.mxu0
    %v243 = vadd.f32 0.0, %v242
    %244 = vdwg.mxu0
    %v245 = vld [vmem:[#allocation7] sm:$0xff]
    %v246 = vld [vmem:[#allocation7 + $0x8] sm:$0xff]
    %v247 = vld [vmem:[#allocation7 + $0x10] sm:$0xff]
    %v248 = vld [vmem:[#allocation7 + $0x18] sm:$0xff]
    %v249 = vld [vmem:[#allocation7 + $0x20] sm:$0xff]
    %v250 = vld [vmem:[#allocation7 + $0x28] sm:$0xff]
    %v251 = vld [vmem:[#allocation7 + $0x30] sm:$0xff]
    %v252 = vld [vmem:[#allocation7 + $0x38] sm:$0xff]
    %v253 = vld [vmem:[#allocation7 + $0x40] sm:$0xff]
    %v254 = vld [vmem:[#allocation7 + $0x48] sm:$0xff]
    %v255 = vld [vmem:[#allocation7 + $0x50] sm:$0xff]
    %v256 = vld [vmem:[#allocation7 + $0x58] sm:$0xff]
    %v257 = vld [vmem:[#allocation7 + $0x60] sm:$0xff]
    %v258 = vld [vmem:[#allocation7 + $0x68] sm:$0xff]
    %v259 = vld [vmem:[#allocation7 + $0x70] sm:$0xff]
    %v260 = vld [vmem:[#allocation7 + $0x78] sm:$0xff]
    %v261 = vunpack.c.h.b16 %v111
    %v262 = vunpack.c.h.b16 %v113
    %v263 = vpack.c.b16 %v262, %v261
    %v281 = vunpack.c.l.b16 %v245
    %v282 = vunpack.c.h.b16 %v245
    %v283 = vunpack.c.l.b16 %v246
    %v284 = vunpack.c.h.b16 %v246
    %v285 = vunpack.c.l.b16 %v247
    %v286 = vunpack.c.h.b16 %v247
    %v287 = vunpack.c.l.b16 %v248
    %v288 = vunpack.c.h.b16 %v248
    %v289 = vunpack.c.l.b16 %v249
    %v290 = vunpack.c.h.b16 %v249
    %v291 = vunpack.c.l.b16 %v250
    %v292 = vunpack.c.h.b16 %v250
    %v293 = vunpack.c.l.b16 %v251
    %v294 = vunpack.c.h.b16 %v251
    %v295 = vunpack.c.l.b16 %v252
    %v296 = vunpack.c.h.b16 %v252
    %v297 = vunpack.c.l.b16 %v253
    %v298 = vunpack.c.h.b16 %v253
    %v299 = vunpack.c.l.b16 %v254
    %v300 = vunpack.c.h.b16 %v254
    %v301 = vunpack.c.l.b16 %v255
    %v302 = vunpack.c.h.b16 %v255
    %v303 = vunpack.c.l.b16 %v256
    %v304 = vunpack.c.h.b16 %v256
    %v305 = vunpack.c.l.b16 %v257
    %v306 = vunpack.c.h.b16 %v257
    %v307 = vunpack.c.l.b16 %v258
    %v308 = vunpack.c.h.b16 %v258
    %v309 = vunpack.c.l.b16 %v259
    %v310 = vunpack.c.h.b16 %v259
    %v311 = vunpack.c.l.b16 %v260
    %v312 = vunpack.c.h.b16 %v260
    %v313 = vpack.c.b16 %v283, %v281
    %v314 = vpack.c.b16 %v284, %v282
    %v315 = vpack.c.b16 %v287, %v285
    %v316 = vpack.c.b16 %v288, %v286
    %v317 = vpack.c.b16 %v291, %v289
    %v318 = vpack.c.b16 %v292, %v290
    %v319 = vpack.c.b16 %v295, %v293
    %v320 = vpack.c.b16 %v296, %v294
    %v321 = vpack.c.b16 %v299, %v297
    %v322 = vpack.c.b16 %v300, %v298
    %v323 = vpack.c.b16 %v303, %v301
    %v324 = vpack.c.b16 %v304, %v302
    %v325 = vpack.c.b16 %v307, %v305
    %v326 = vpack.c.b16 %v308, %v306
    %v327 = vpack.c.b16 %v311, %v309
    %v328 = vpack.c.b16 %v312, %v310
    %345 = vmatpush.bf16.msra.mxu0 %v327
    %346 = vmatpush.bf16.msra.mxu0 %v325
    %347 = vmatpush.bf16.msra.mxu0 %v323
    %348 = vmatpush.bf16.msra.mxu0 %v321
    %349 = vmatpush.bf16.msra.mxu0 %v319
    %350 = vmatpush.bf16.msra.mxu0 %v317
    %351 = vmatpush.bf16.msra.mxu0 %v315
    %352 = vmatpush.bf16.msra.mxu0 %v313
    %353 = vmatmul.bf16.gmra.mxu0 %v263
    %v354 = vpop.f32.mrf.mxu0
    %v355 = vadd.f32 0.0, %v354
    %v356 = vpop.f32.mrf.mxu0
    %v357 = vadd.f32 0.0, %v356
    %358 = vdwg.mxu0
    %359 = vmatpush.bf16.msra.mxu0 %v328
    %360 = vmatpush.bf16.msra.mxu0 %v326
    %361 = vmatpush.bf16.msra.mxu0 %v324
    %362 = vmatpush.bf16.msra.mxu0 %v322
    %363 = vmatpush.bf16.msra.mxu0 %v320
    %364 = vmatpush.bf16.msra.mxu0 %v318
    %365 = vmatpush.bf16.msra.mxu0 %v316
    %366 = vmatpush.bf16.msra.mxu0 %v314
    %367 = vmatmul.bf16.gmra.mxu0 %v263
    %v368 = vpop.f32.mrf.mxu0
    %v369 = vadd.f32 0.0, %v368
    %v370 = vpop.f32.mrf.mxu0
    %v371 = vadd.f32 0.0, %v370
    %372 = vdwg.mxu0
    %v373 = vld [vmem:[#allocation8] sm:$0xf]
    %v374 = vld [vmem:[#allocation8 + $0x4] sm:$0xf]
    %v375 = vld [vmem:[#allocation8 + $0x8] sm:$0xf]
    %v376 = vld [vmem:[#allocation8 + $0xc] sm:$0xf]
    %v377 = vld [vmem:[#allocation8 + $0x10] sm:$0xf]
    %v378 = vld [vmem:[#allocation8 + $0x14] sm:$0xf]
    %v379 = vld [vmem:[#allocation8 + $0x18] sm:$0xf]
    %v380 = vld [vmem:[#allocation8 + $0x1c] sm:$0xf]
    %v381 = vld [vmem:[#allocation8 + $0x20] sm:$0xf]
    %v382 = vld [vmem:[#allocation8 + $0x24] sm:$0xf]
    %v383 = vld [vmem:[#allocation8 + $0x28] sm:$0xf]
    %v384 = vld [vmem:[#allocation8 + $0x2c] sm:$0xf]
    %v385 = vld [vmem:[#allocation8 + $0x30] sm:$0xf]
    %v386 = vld [vmem:[#allocation8 + $0x34] sm:$0xf]
    %v387 = vld [vmem:[#allocation8 + $0x38] sm:$0xf]
    %v388 = vld [vmem:[#allocation8 + $0x3c] sm:$0xf]
    %v391 = vunpack.c.l.b16 %v112
    %v392 = vunpack.c.l.b16 %v114
    %v393 = vpack.c.b16 %v392, %v391
    %v411 = vunpack.c.l.b16 %v373
    %v412 = vunpack.c.l.b16 %v374
    %v413 = vunpack.c.l.b16 %v375
    %v414 = vunpack.c.l.b16 %v376
    %v415 = vunpack.c.l.b16 %v377
    %v416 = vunpack.c.l.b16 %v378
    %v417 = vunpack.c.l.b16 %v379
    %v418 = vunpack.c.l.b16 %v380
    %v419 = vunpack.c.l.b16 %v381
    %v420 = vunpack.c.l.b16 %v382
    %v421 = vunpack.c.l.b16 %v383
    %v422 = vunpack.c.l.b16 %v384
    %v423 = vunpack.c.l.b16 %v385
    %v424 = vunpack.c.l.b16 %v386
    %v425 = vunpack.c.l.b16 %v387
    %v426 = vunpack.c.l.b16 %v388
    %v427 = vpack.c.b16 %v412, %v411
    %v428 = vpack.c.b16 %v414, %v413
    %v429 = vpack.c.b16 %v416, %v415
    %v430 = vpack.c.b16 %v418, %v417
    %v431 = vpack.c.b16 %v420, %v419
    %v432 = vpack.c.b16 %v422, %v421
    %v433 = vpack.c.b16 %v424, %v423
    %v434 = vpack.c.b16 %v426, %v425
    %443 = vmatpush.bf16.msra.mxu0 %v434
    %444 = vmatpush.bf16.msra.mxu0 %v433
    %445 = vmatpush.bf16.msra.mxu0 %v432
    %446 = vmatpush.bf16.msra.mxu0 %v431
    %447 = vmatpush.bf16.msra.mxu0 %v430
    %448 = vmatpush.bf16.msra.mxu0 %v429
    %449 = vmatpush.bf16.msra.mxu0 %v428
    %450 = vmatpush.bf16.msra.mxu0 %v427
    %451 = vmatmul.bf16.gmra.mxu0 %v393
    %v452 = vpop.f32.mrf.mxu0
    %v453 = vadd.f32 0.0, %v452
    %v454 = vpop.f32.mrf.mxu0
    %v455 = vadd.f32 0.0, %v454
    %456 = vdwg.mxu0
    %v457 = vadd.f32 %v227, %v355
    %v458 = vadd.f32 %v229, %v357
    %v459 = vadd.f32 %v457, %v453
    %v460 = vadd.f32 %v458, %v455
    %v461 = vld [vmem:[%s5] sm:$0x1]
    %v463 = vperm.slane %v461, 0
    %v465 = vadd.f32 %v459, %v463
    %v466 = vadd.f32 %v460, %v463
    %v467 = vpack.c.bf16 %v466, %v465
    %v468 = vld [vmem:[#allocation10] sm:$0xff]
    %v469 = vld [vmem:[#allocation10 + $0x8] sm:$0xff]
    %v470 = vld [vmem:[#allocation10 + $0x10] sm:$0xff]
    %v471 = vld [vmem:[#allocation10 + $0x18] sm:$0xff]
    %v472 = vld [vmem:[#allocation10 + $0x20] sm:$0xff]
    %v473 = vld [vmem:[#allocation10 + $0x28] sm:$0xff]
    %v474 = vld [vmem:[#allocation10 + $0x30] sm:$0xff]
    %v475 = vld [vmem:[#allocation10 + $0x38] sm:$0xff]
    %v476 = vld [vmem:[#allocation10 + $0x40] sm:$0xff]
    %v477 = vld [vmem:[#allocation10 + $0x48] sm:$0xff]
    %v478 = vld [vmem:[#allocation10 + $0x50] sm:$0xff]
    %v479 = vld [vmem:[#allocation10 + $0x58] sm:$0xff]
    %v480 = vld [vmem:[#allocation10 + $0x60] sm:$0xff]
    %v481 = vld [vmem:[#allocation10 + $0x68] sm:$0xff]
    %v482 = vld [vmem:[#allocation10 + $0x70] sm:$0xff]
    %v483 = vld [vmem:[#allocation10 + $0x78] sm:$0xff]
    %v500 = vunpack.c.l.b16 %v468
    %v501 = vunpack.c.h.b16 %v468
    %v502 = vunpack.c.l.b16 %v469
    %v503 = vunpack.c.h.b16 %v469
    %v504 = vunpack.c.l.b16 %v470
    %v505 = vunpack.c.h.b16 %v470
    %v506 = vunpack.c.l.b16 %v471
    %v507 = vunpack.c.h.b16 %v471
    %v508 = vunpack.c.l.b16 %v472
    %v509 = vunpack.c.h.b16 %v472
    %v510 = vunpack.c.l.b16 %v473
    %v511 = vunpack.c.h.b16 %v473
    %v512 = vunpack.c.l.b16 %v474
    %v513 = vunpack.c.h.b16 %v474
    %v514 = vunpack.c.l.b16 %v475
    %v515 = vunpack.c.h.b16 %v475
    %v516 = vunpack.c.l.b16 %v476
    %v517 = vunpack.c.h.b16 %v476
    %v518 = vunpack.c.l.b16 %v477
    %v519 = vunpack.c.h.b16 %v477
    %v520 = vunpack.c.l.b16 %v478
    %v521 = vunpack.c.h.b16 %v478
    %v522 = vunpack.c.l.b16 %v479
    %v523 = vunpack.c.h.b16 %v479
    %v524 = vunpack.c.l.b16 %v480
    %v525 = vunpack.c.h.b16 %v480
    %v526 = vunpack.c.l.b16 %v481
    %v527 = vunpack.c.h.b16 %v481
    %v528 = vunpack.c.l.b16 %v482
    %v529 = vunpack.c.h.b16 %v482
    %v530 = vunpack.c.l.b16 %v483
    %v531 = vunpack.c.h.b16 %v483
    %v532 = vpack.c.b16 %v502, %v500
    %v533 = vpack.c.b16 %v503, %v501
    %v534 = vpack.c.b16 %v506, %v504
    %v535 = vpack.c.b16 %v507, %v505
    %v536 = vpack.c.b16 %v510, %v508
    %v537 = vpack.c.b16 %v511, %v509
    %v538 = vpack.c.b16 %v514, %v512
    %v539 = vpack.c.b16 %v515, %v513
    %v540 = vpack.c.b16 %v518, %v516
    %v541 = vpack.c.b16 %v519, %v517
    %v542 = vpack.c.b16 %v522, %v520
    %v543 = vpack.c.b16 %v523, %v521
    %v544 = vpack.c.b16 %v526, %v524
    %v545 = vpack.c.b16 %v527, %v525
    %v546 = vpack.c.b16 %v530, %v528
    %v547 = vpack.c.b16 %v531, %v529
    %564 = vmatpush.bf16.msra.mxu0 %v546
    %565 = vmatpush.bf16.msra.mxu0 %v544
    %566 = vmatpush.bf16.msra.mxu0 %v542
    %567 = vmatpush.bf16.msra.mxu0 %v540
    %568 = vmatpush.bf16.msra.mxu0 %v538
    %569 = vmatpush.bf16.msra.mxu0 %v536
    %570 = vmatpush.bf16.msra.mxu0 %v534
    %571 = vmatpush.bf16.msra.mxu0 %v532
    %572 = vmatmul.bf16.gmra.mxu0 %v467
    %v573 = vpop.f32.mrf.mxu0
    %v574 = vadd.f32 0.0, %v573
    %v575 = vpop.f32.mrf.mxu0
    %v576 = vadd.f32 0.0, %v575
    %577 = vdwg.mxu0
    %578 = vmatpush.bf16.msra.mxu0 %v547
    %579 = vmatpush.bf16.msra.mxu0 %v545
    %580 = vmatpush.bf16.msra.mxu0 %v543
    %581 = vmatpush.bf16.msra.mxu0 %v541
    %582 = vmatpush.bf16.msra.mxu0 %v539
    %583 = vmatpush.bf16.msra.mxu0 %v537
    %584 = vmatpush.bf16.msra.mxu0 %v535
    %585 = vmatpush.bf16.msra.mxu0 %v533
    %586 = vmatmul.bf16.gmra.mxu0 %v467
    %v587 = vpop.f32.mrf.mxu0
    %v588 = vadd.f32 0.0, %v587
    %v589 = vpop.f32.mrf.mxu0
    %v590 = vadd.f32 0.0, %v589
    %591 = vdwg.mxu0
    %v592 = vadd.f32 %v241, %v574
    %v593 = vadd.f32 %v243, %v576
    %v594 = vld [vmem:[%s6] sm:$0x1]
    %v596 = vperm.slane %v594, 0
    %v598 = vadd.f32 %v592, %v596
    %v599 = vadd.f32 %v593, %v596
    %v600 = vadd.f32 %v369, %v588
    %v601 = vadd.f32 %v371, %v590
    %v602 = vld [vmem:[%s7] sm:$0x1]
    %v604 = vperm.slane %v602, 0
    %v606 = vadd.f32 %v600, %v604
    %v607 = vadd.f32 %v601, %v604
    %608 = vst [vmem:[#allocation11] sm:$0xff] %v465
    %609 = vst [vmem:[#allocation11 + $0x8] sm:$0xff] %v466
    %v610 = vmul.f32 %v598, %v606
    %v611 = vmul.f32 %v599, %v607
    %612 = vadd.xlane.f32.xlu0 %v610
    %v613 = vpop.xlane.xlu0 %612
    %614 = vadd.xlane.f32.xlu0 %v611
    %v615 = vpop.xlane.xlu0 %614
    %v616 = vmul.f32 %v613, 0.17677669
    %v617 = vmul.f32 %v615, 0.17677669
    %618 = vst [vmem:[#allocation12] sm:$0xff] %v616
    %619 = vst [vmem:[#allocation12 + $0x8] sm:$0xff] %v617
    // Predicated region
    $region54: #{tpu_custom_call.1} parent=1 // pred_check
      _
    $region55: #{tpu_custom_call.1} parent=1 // pred_check_branch
      %621 = sbr.rel (0) target = $region57
    $region56: #{tpu_custom_call.1} parent=1 // pred_region
      %623 = vsyncadd [#allocation4], 0
      %s624 = sshll.u32 [#allocation11], 4
      %s625 = int_to_ptr.vmem [resolvable:$true] %s624
      %s626 = sshll.u32 %s8, 4
      %s627 = int_to_ptr.hbm [resolvable:$true] %s626
      %632 = dma.vmem_to_hbm [thread:$0]  %s625, 256, %s627, [#allocation4], 128, 128, 8
    $region57: #{tpu_custom_call.1} parent=1 // pred_fallthru
      _
    // Predicated region
    $region58: #{tpu_custom_call.1} parent=1 // pred_check
      _
    $region59: #{tpu_custom_call.1} parent=1 // pred_check_branch
      %634 = sbr.rel (0) target = $region61
    $region60: #{tpu_custom_call.1} parent=1 // pred_region
      %636 = vsyncadd [#allocation13], 0
      %s637 = sshll.u32 [#allocation12], 4
      %s638 = int_to_ptr.vmem [resolvable:$true] %s637
      %s639 = sshll.u32 %s9, 4
      %s640 = int_to_ptr.hbm [resolvable:$true] %s639
      %645 = dma.vmem_to_hbm [thread:$0]  %s638, 256, %s640, [#allocation13], 128, 128, 8
    $region61: #{tpu_custom_call.1} parent=1 // pred_fallthru
      _
    // Predicated region
    $region62: #{tpu_custom_call.1} parent=1 // pred_check
      _
    $region63: #{tpu_custom_call.1} parent=1 // pred_check_branch
      %647 = sbr.rel (0) target = $region65
    $region64: #{tpu_custom_call.1} parent=1 // pred_region
      %649 = dma.done [#allocation4], 256
    $region65: #{tpu_custom_call.1} parent=1 // pred_fallthru
      _
    // Predicated region
    $region66: #{tpu_custom_call.1} parent=1 // pred_check
      _
    $region67: #{tpu_custom_call.1} parent=1 // pred_check_branch
      %651 = sbr.rel (0) target = $region69
    $region68: #{tpu_custom_call.1} parent=1 // pred_region
      %653 = dma.done [#allocation13], 256
    $region69: #{tpu_custom_call.1} parent=1 // pred_fallthru
      _
    %654 = vsyncpa [#allocation3], 1
    %655 = vsyncpa [#allocation6], 1
    %656 = vsyncpa [#allocation9], 1
    %657 = vsyncpa [#allocation4], 1
    %658 = vsyncpa [#allocation13], 1

</llo_original>
